<compile_context>
chip_gen: v5e
topology: v5e:2x2
jax: 0.10.0
libtpu: 0.0.40
codegen_flags: <defaults>
</compile_context>

<pallas_src>
import jax
import jax.numpy as jnp
from jax.experimental import pallas as pl
from jax.experimental.pallas import tpu as pltpu


def _round_up(x, m):
    return (x + m - 1) // m * m


def _pad_cols(a, width):
    pad = width - a.shape[-1]
    return a if pad == 0 else jnp.pad(a, ((0, 0), (0, pad)))


def _vmem_limit_bytes(needed):
    # Generation-aware scoped-VMEM cap: physical VMEM minus ~16 MiB headroom for
    # Mosaic-internal scratch / compiler temporaries (v7x 64 MiB -> ~48 MiB cap,
    # v5e/v6e 128 MiB -> ~112 MiB cap); never request less than 32 MiB.
    try:
        cap = int(getattr(pltpu.get_tpu_info(), "vmem_capacity_bytes", 64 << 20))
    except Exception:
        cap = 64 << 20
    hard_cap = max(cap - (16 << 20), 16 << 20)
    return int(min(hard_cap, max(32 << 20, 2 * int(needed))))


def _lstm_seq_kernel(xs_ref, h0_ref, c0_ref, w_ref, b_ref,
                     hs_ref, cs_ref, xh_scr, h_scr, c_scr):
    t = pl.program_id(1)
    Hp = c_scr.shape[-1]
    Ip = xh_scr.shape[-1] - Hp
    I = xs_ref.shape[-1]

    @pl.when(t == 0)
    def _():
        if Ip != I:
            # x-padding lanes [I, Ip) hit zero weight rows, but VMEM scratch is
            # uninitialized (NaN * 0 = NaN) -- clear once per batch tile.
            xh_scr[...] = jnp.zeros_like(xh_scr)
        h_scr[...] = h0_ref[...].astype(h_scr.dtype)
        c_scr[...] = c0_ref[...].astype(c_scr.dtype)

    # Stage [x_t | h_{t-1}] into one bf16 buffer -> single stacked-K MXU pass.
    xh_scr[:, :I] = xs_ref[0].astype(xh_scr.dtype)
    xh_scr[:, Ip:] = h_scr[...]

    gates = jnp.dot(xh_scr[...], w_ref[...],
                    preferred_element_type=jnp.float32) + b_ref[...]

    # Lane-aligned gate slices (Hp is a multiple of 128). Gate order i, j, f, o
    # with tanh / sigmoid / sigmoid / tanh, matching the PyTorch module.
    i = jnp.tanh(gates[:, 0 * Hp:1 * Hp])
    j = jax.nn.sigmoid(gates[:, 1 * Hp:2 * Hp])
    f = jax.nn.sigmoid(gates[:, 2 * Hp:3 * Hp])
    o = jnp.tanh(gates[:, 3 * Hp:4 * Hp])

    celldot = c_scr[...] * f + i * j
    statedot = jnp.tanh(celldot) * o

    # Carry: h in bf16 (only feeds the MXU next step), c in f32 (precision).
    c_scr[...] = celldot
    h_scr[...] = statedot.astype(h_scr.dtype)

    hs_ref[0] = statedot.astype(hs_ref.dtype)
    cs_ref[0] = celldot.astype(cs_ref.dtype)


_WEIGHT_SINGLE_BUFFER_OK = [True]  # flipped off if this build rejects pl.Buffered(1)


def lstm_concatgrouped_sequence(xs, state, cell, params, *,
                                batch_tile=256, unpad_outputs=True):
    """Run T LSTM-cell steps with the time loop inside the kernel.

    xs: [T, B, input_size]; state/cell: [B, H] or lane-padded [B, Hp].
    Returns (statedots, celldots), each [T, B, H] (or [T, B, Hp] when
    unpad_outputs=False -- keep the padded carry to avoid pad/slice passes).
    """
    assert xs.ndim == 3
    T, B, I = xs.shape
    w, b = params["w"], params["b"]
    H = params["hidden_size"]
    Hp = w.shape[1] // 4
    Ip = w.shape[0] - Hp
    assert I == params["input_size"]
    assert state.shape[-1] in (H, Hp) and cell.shape[-1] in (H, Hp)

    h0 = _pad_cols(state, Hp)
    c0 = _pad_cols(cell, Hp)

    TB = min(_round_up(B, 16), batch_tile)   # bf16 sublane packing: 16 rows
    grid = (pl.cdiv(B, TB), T)               # ("parallel", "arbitrary")

    out_dtype = xs.dtype
    act_item = jnp.dtype(out_dtype).itemsize

    w_bytes = w.size * w.dtype.itemsize + b.size * b.dtype.itemsize
    io_bytes = (xs.size * xs.dtype.itemsize
                + h0.size * h0.dtype.itemsize + c0.size * c0.dtype.itemsize
                + 2 * T * B * Hp * act_item)
    cost = pl.CostEstimate(
        flops=2 * T * B * (Ip + Hp) * 4 * Hp,
        transcendentals=5 * T * B * Hp,   # tanh(i), sig(j), sig(f), tanh(o), tanh(c')
        bytes_accessed=int(w_bytes + io_bytes),
    )

    tile_bytes = (TB * I * xs.dtype.itemsize
                  + TB * Hp * (h0.dtype.itemsize + c0.dtype.itemsize)
                  + 2 * TB * Hp * act_item)
    scratch_bytes = (TB * (Ip + Hp) * w.dtype.itemsize        # [x|h] buffer
                     + TB * Hp * (w.dtype.itemsize + 4)       # h (bf16) + c (f32)
                     + TB * 4 * Hp * 4)                       # gates temp
    vmem_needed = 2 * w_bytes + 2 * tile_bytes + scratch_bytes + (2 << 20)
    vmem_limit = _vmem_limit_bytes(vmem_needed)

    row3 = lambda bi, t: (t, bi, 0)
    row2 = lambda bi, t: (bi, 0)
    const2 = lambda bi, t: (0, 0)

    def build_call(single_buffer_weights):
        if single_buffer_weights:
            # Constant block index -> single-buffer the resident weights.
            wspec = pl.BlockSpec((Ip + Hp, 4 * Hp), const2,
                                 pipeline_mode=pl.Buffered(1))
            bspec = pl.BlockSpec((1, 4 * Hp), const2,
                                 pipeline_mode=pl.Buffered(1))
        else:
            wspec = pl.BlockSpec((Ip + Hp, 4 * Hp), const2)
            bspec = pl.BlockSpec((1, 4 * Hp), const2)
        return pl.pallas_call(
            _lstm_seq_kernel,
            out_shape=(jax.ShapeDtypeStruct((T, B, Hp), out_dtype),
                       jax.ShapeDtypeStruct((T, B, Hp), out_dtype)),
            grid_spec=pltpu.PrefetchScalarGridSpec(
                num_scalar_prefetch=0,
                grid=grid,
                in_specs=[
                    pl.BlockSpec((1, TB, I), row3),   # x_t batch tile
                    pl.BlockSpec((TB, Hp), row2),     # h0 batch tile
                    pl.BlockSpec((TB, Hp), row2),     # c0 batch tile
                    wspec,                            # fused [x;h] weights (resident)
                    bspec,                            # fused bias (resident)
                ],
                out_specs=(
                    pl.BlockSpec((1, TB, Hp), row3),  # statedot_t (lane-dense)
                    pl.BlockSpec((1, TB, Hp), row3),  # celldot_t  (lane-dense)
                ),
                scratch_shapes=[
                    pltpu.VMEM((TB, Ip + Hp), w.dtype),   # [x | h] concat buffer
                    pltpu.VMEM((TB, Hp), w.dtype),        # carried h (bf16)
                    pltpu.VMEM((TB, Hp), jnp.float32),    # carried c (f32)
                ],
            ),
            compiler_params=pltpu.CompilerParams(
                dimension_semantics=("parallel", "arbitrary"),
                vmem_limit_bytes=vmem_limit,
            ),
            cost_estimate=cost,
        )

    hs = cs = None
    if _WEIGHT_SINGLE_BUFFER_OK[0]:
        try:
            hs, cs = build_call(True)(xs, h0, c0, w, b)
        except Exception:
            _WEIGHT_SINGLE_BUFFER_OK[0] = False
    if hs is None:
        hs, cs = build_call(False)(xs, h0, c0, w, b)

    if unpad_outputs and Hp != H:
        hs = hs[..., :H]
        cs = cs[..., :H]
    return hs, cs


def my_lstm_cell_concatgrouped(x, state, cell, params, *, batch_tile=256):
    """Single-step forward matching MyLSTMCell_concatgrouped.forward exactly.

    x: [B, input_size], state/cell: [B, hidden_size]. Returns (statedot, celldot).
    """
    hs, cs = lstm_concatgrouped_sequence(x[None], state, cell, params,
                                         batch_tile=batch_tile,
                                         unpad_outputs=True)
    return hs[0], cs[0]


def init_params(key, input_size, hidden_size, param_dtype=jnp.bfloat16):
    """Build the 8 nn.Linear layers, then fold them into the fused kernel layout.

    Returns (params, raw_layers):
      params["w"]: [(Ip+Hp), 4*Hp] param_dtype  -- rows [0,I) hit x, rows
                   [Ip, Ip+H) hit h; padding rows/columns are zero.
      params["b"]: [1, 4*Hp] float32            -- ba + bb folded per gate.
      raw_layers:  per-gate (wa, ba, wb, bb) in torch [out, in] layout, f32.
    """
    I, H = input_size, hidden_size
    K = I // 2 + H // 2
    Ip = _round_up(I, 128)
    Hp = _round_up(H, 128)
    bound = 1.0 / (K ** 0.5)
    keys = jax.random.split(key, 16)

    def linear(kw, kb):
        wmat = jax.random.uniform(kw, (H, K), jnp.float32, -bound, bound)
        bvec = jax.random.uniform(kb, (H,), jnp.float32, -bound, bound)
        return wmat, bvec

    raw_layers = []
    for g in range(4):  # gates i, j, f, o  <->  layers h1, h2, h3, h4
        wa, ba = linear(keys[4 * g + 0], keys[4 * g + 1])
        wb, bb = linear(keys[4 * g + 2], keys[4 * g + 3])
        raw_layers.append((wa, ba, wb, bb))

    # Fold: c1@Wa^T + c2@Wb^T + ba + bb  ==  x@Wx + h@Wh + (ba+bb)
    # with Wx = [Wa^T_top; Wb^T_top] (rows hit by x1|x2), Wh = [Wa^T_bot; Wb^T_bot].
    wx_cols, wh_cols, b_cols = [], [], []
    for wa, ba, wb, bb in raw_layers:
        waT, wbT = wa.T, wb.T                                         # [K, H]
        wx_g = jnp.concatenate([waT[:I // 2], wbT[:I // 2]], axis=0)  # [I, H]
        wh_g = jnp.concatenate([waT[I // 2:], wbT[I // 2:]], axis=0)  # [H, H]
        wx_cols.append(jnp.pad(wx_g, ((0, 0), (0, Hp - H))))
        wh_cols.append(jnp.pad(wh_g, ((0, 0), (0, Hp - H))))
        b_cols.append(jnp.pad(ba + bb, (0, Hp - H)))

    wx_full = jnp.concatenate(wx_cols, axis=1)                        # [I, 4Hp]
    wh_full = jnp.concatenate(wh_cols, axis=1)                        # [H, 4Hp]
    w = jnp.concatenate([
        jnp.pad(wx_full, ((0, Ip - I), (0, 0))),                      # x rows (padded)
        jnp.pad(wh_full, ((0, Hp - H), (0, 0))),                      # h rows (padded)
    ], axis=0).astype(param_dtype)                                    # [(Ip+Hp), 4Hp]

    params = {
        "w": w,
        "b": jnp.concatenate(b_cols)[None, :].astype(jnp.float32),    # [1, 4Hp]
        "input_size": I,
        "hidden_size": H,
    }
    return params, raw_layers


def _reference_folded_scan(xs, state, cell, params):
    """Pure-JAX scan mirroring kernel numerics (bf16 fused W, f32 acc, bf16 h carry)."""
    w, b = params["w"], params["b"]
    I, H = params["input_size"], params["hidden_size"]
    Hp = w.shape[1] // 4
    Ip = w.shape[0] - Hp
    wx = w[:I]            # [I, 4Hp]
    wh = w[Ip:Ip + H]     # [H, 4Hp]
    cdt = w.dtype

    def step(carry, x):
        h, c = carry
        gates = (jnp.dot(x.astype(cdt), wx, preferred_element_type=jnp.float32)
                 + jnp.dot(h, wh, preferred_element_type=jnp.float32) + b)
        i = jnp.tanh(gates[:, 0 * Hp:0 * Hp + H])
        j = jax.nn.sigmoid(gates[:, 1 * Hp:1 * Hp + H])
        f = jax.nn.sigmoid(gates[:, 2 * Hp:2 * Hp + H])
        o = jnp.tanh(gates[:, 3 * Hp:3 * Hp + H])
        celldot = c * f + i * j
        statedot = jnp.tanh(celldot) * o
        return (statedot.astype(cdt), celldot), (statedot, celldot)

    init = (state.astype(cdt), cell.astype(jnp.float32))
    _, (hs, cs) = jax.lax.scan(step, init, xs)
    return hs, cs


def _reference_module(x, state, cell, raw_layers, input_size, hidden_size):
    """Pure-JAX reference mirroring the original PyTorch forward (f32, unfolded)."""
    I, H = input_size, hidden_size
    c1 = jnp.concatenate([x[:, :I // 2], state[:, :H // 2]], axis=1)
    c2 = jnp.concatenate([x[:, I // 2:], state[:, H // 2:]], axis=1)

    def lin(w, b, inp):
        return inp @ w.T + b

    (wa1, ba1, wb1, bb1), (wa2, ba2, wb2, bb2), \
        (wa3, ba3, wb3, bb3), (wa4, ba4, wb4, bb4) = raw_layers
    i = jnp.tanh(lin(wa1, ba1, c1) + lin(wb1, bb1, c2))
    j = jax.nn.sigmoid(lin(wa2, ba2, c1) + lin(wb2, bb2, c2))
    f = jax.nn.sigmoid(lin(wa3, ba3, c1) + lin(wb3, bb3, c2))
    o = jnp.tanh(lin(wa4, ba4, c1) + lin(wb4, bb4, c2))
    celldot = cell * f + i * j
    statedot = jnp.tanh(celldot) * o
    return statedot, celldot


if __name__ == "__main__":
    batch = 8
    input_size = 32
    hidden_size = 32
    seq_len = 4

    key = jax.random.PRNGKey(0)
    k_x, k_h, k_c, k_p, k_xs = jax.random.split(key, 5)
    x = jax.random.normal(k_x, (batch, input_size), jnp.float32)
    state = jax.random.normal(k_h, (batch, hidden_size), jnp.float32)
    cell = jax.random.normal(k_c, (batch, hidden_size), jnp.float32)
    params, raw_layers = init_params(k_p, input_size, hidden_size)

    # --- Single cell step (exact module semantics) ---
    statedot, celldot = my_lstm_cell_concatgrouped(x, state, cell, params)
    jax.block_until_ready((statedot, celldot))

    ref_s, ref_c = _reference_folded_scan(x[None], state, cell, params)
    assert jnp.allclose(statedot, ref_s[0], atol=2e-3, rtol=2e-3)
    assert jnp.allclose(celldot, ref_c[0], atol=2e-3, rtol=2e-3)

    ref_s2, ref_c2 = _reference_module(x, state, cell, raw_layers,
                                       input_size, hidden_size)
    assert jnp.allclose(statedot, ref_s2, atol=5e-2, rtol=0)
    assert jnp.allclose(celldot, ref_c2, atol=5e-2, rtol=0)

    # --- Multi-step sequence (time loop inside the kernel, weights amortized) ---
    xs = jax.random.normal(k_xs, (seq_len, batch, input_size), jnp.float32)
    hs, cs = lstm_concatgrouped_sequence(xs, state, cell, params)
    jax.block_until_ready((hs, cs))
    ref_hs, ref_cs = _reference_folded_scan(xs, state, cell, params)
    assert jnp.allclose(hs, ref_hs, atol=5e-3, rtol=5e-3)
    assert jnp.allclose(cs, ref_cs, atol=5e-3, rtol=5e-3)

    print("KERNEL_OK")
</pallas_src>

<mosaic_0001>
module attributes {stable_mosaic.version = 11 : i64} {
  func.func @_lstm_seq_kernel(%arg0: i32, %arg1: i32, %arg2: memref<1x16x32xf32, #tpu.memory_space<vmem>>, %arg3: memref<16x128xf32, #tpu.memory_space<vmem>>, %arg4: memref<16x128xf32, #tpu.memory_space<vmem>>, %arg5: memref<256x512xbf16, #tpu.memory_space<vmem>>, %arg6: memref<1x512xf32, #tpu.memory_space<vmem>>, %arg7: memref<1x16x128xf32, #tpu.memory_space<vmem>>, %arg8: memref<1x16x128xf32, #tpu.memory_space<vmem>>, %arg9: memref<16x256xbf16, #tpu.memory_space<vmem>>, %arg10: memref<16x128xbf16, #tpu.memory_space<vmem>>, %arg11: memref<16x128xf32, #tpu.memory_space<vmem>>) attributes {dimension_semantics = [#tpu.dimension_semantics<parallel>, #tpu.dimension_semantics<arbitrary>], iteration_bounds = array<i64: 1, 1>, scalar_prefetch = 0 : i64, scratch_operands = 3 : i64, tpu.core_type = #tpu.core_type<tc>, window_params = [{transform_indices = @transform_0, window_bounds = array<i64: 1, 16, 32>}, {transform_indices = @transform_1, window_bounds = array<i64: 16, 128>}, {transform_indices = @transform_2, window_bounds = array<i64: 16, 128>}, {pipeline_mode = #tpu.pipeline_mode<synchronous>, transform_indices = @transform_3, window_bounds = array<i64: 256, 512>}, {pipeline_mode = #tpu.pipeline_mode<synchronous>, transform_indices = @transform_4, window_bounds = array<i64: 1, 512>}, {transform_indices = @transform_5, window_bounds = array<i64: 1, 16, 128>}, {transform_indices = @transform_6, window_bounds = array<i64: 1, 16, 128>}]} {
    %c0_i32 = arith.constant 0 : i32
    %0 = arith.cmpi eq, %arg1, %c0_i32 : i32
    %1 = arith.extui %0 : i1 to i32
    %c0_i32_0 = arith.constant 0 : i32
    %2 = arith.cmpi ne, %1, %c0_i32_0 : i32
    scf.if %2 {
      %cst_28 = arith.constant 0.000000e+00 : bf16
      %46 = vector.broadcast %cst_28 : bf16 to vector<16x256xbf16>
      %c0_29 = arith.constant 0 : index
      %c0_30 = arith.constant 0 : index
      %47 = vector.load %arg9[%c0_29, %c0_30] : memref<16x256xbf16, #tpu.memory_space<vmem>>, vector<16x256xbf16>
      tpu.vector_store %arg9[%c0_29, %c0_30], %46 {strides = array<i32>} : memref<16x256xbf16, #tpu.memory_space<vmem>>, vector<16x256xbf16>,
      %c0_31 = arith.constant 0 : index
      %c0_32 = arith.constant 0 : index
      %48 = vector.load %arg3[%c0_31, %c0_32] : memref<16x128xf32, #tpu.memory_space<vmem>>, vector<16x128xf32>
      %49 = arith.truncf %48 : vector<16x128xf32> to vector<16x128xbf16>
      %c0_33 = arith.constant 0 : index
      %c0_34 = arith.constant 0 : index
      %50 = vector.load %arg10[%c0_33, %c0_34] : memref<16x128xbf16, #tpu.memory_space<vmem>>, vector<16x128xbf16>
      tpu.vector_store %arg10[%c0_33, %c0_34], %49 {strides = array<i32>} : memref<16x128xbf16, #tpu.memory_space<vmem>>, vector<16x128xbf16>,
      %c0_35 = arith.constant 0 : index
      %c0_36 = arith.constant 0 : index
      %51 = vector.load %arg4[%c0_35, %c0_36] : memref<16x128xf32, #tpu.memory_space<vmem>>, vector<16x128xf32>
      %c0_37 = arith.constant 0 : index
      %c0_38 = arith.constant 0 : index
      %52 = vector.load %arg11[%c0_37, %c0_38] : memref<16x128xf32, #tpu.memory_space<vmem>>, vector<16x128xf32>
      tpu.vector_store %arg11[%c0_37, %c0_38], %51 {strides = array<i32>} : memref<16x128xf32, #tpu.memory_space<vmem>>, vector<16x128xf32>,
    } else {
    }
    %c0 = arith.constant 0 : index
    %c0_1 = arith.constant 0 : index
    %c0_2 = arith.constant 0 : index
    %3 = vector.load %arg2[%c0, %c0_1, %c0_2] : memref<1x16x32xf32, #tpu.memory_space<vmem>>, vector<1x16x32xf32>
    %4 = vector.shape_cast %3 : vector<1x16x32xf32> to vector<16x32xf32>
    %5 = arith.truncf %4 : vector<16x32xf32> to vector<16x32xbf16>
    %c0_3 = arith.constant 0 : index
    %c0_4 = arith.constant 0 : index
    %6 = vector.load %arg9[%c0_3, %c0_4] : memref<16x256xbf16, #tpu.memory_space<vmem>>, vector<16x32xbf16>
    tpu.vector_store %arg9[%c0_3, %c0_4], %5 {strides = array<i32>} : memref<16x256xbf16, #tpu.memory_space<vmem>>, vector<16x32xbf16>,
    %c0_5 = arith.constant 0 : index
    %c0_6 = arith.constant 0 : index
    %7 = vector.load %arg10[%c0_5, %c0_6] : memref<16x128xbf16, #tpu.memory_space<vmem>>, vector<16x128xbf16>
    %c0_7 = arith.constant 0 : index
    %c128 = arith.constant 128 : index
    %8 = vector.load %arg9[%c0_7, %c128] : memref<16x256xbf16, #tpu.memory_space<vmem>>, vector<16x128xbf16>
    tpu.vector_store %arg9[%c0_7, %c128], %7 {strides = array<i32>} : memref<16x256xbf16, #tpu.memory_space<vmem>>, vector<16x128xbf16>,
    %c0_8 = arith.constant 0 : index
    %c0_9 = arith.constant 0 : index
    %9 = vector.load %arg9[%c0_8, %c0_9] : memref<16x256xbf16, #tpu.memory_space<vmem>>, vector<16x256xbf16>
    %c0_10 = arith.constant 0 : index
    %c0_11 = arith.constant 0 : index
    %10 = vector.load %arg5[%c0_10, %c0_11] : memref<256x512xbf16, #tpu.memory_space<vmem>>, vector<256x512xbf16>
    %cst = arith.constant dense<0.000000e+00> : vector<16x512xf32>
    %11 = tpu.matmul %9, %10, %cst {dimension_numbers = #tpu.dot_dimension_numbers<[1], [0], [0], [1], [0, 0, 1, 1], [], []>} : vector<16x256xbf16>, vector<256x512xbf16>, vector<16x512xf32> -> vector<16x512xf32>
    %c0_12 = arith.constant 0 : index
    %c0_13 = arith.constant 0 : index
    %12 = vector.load %arg6[%c0_12, %c0_13] : memref<1x512xf32, #tpu.memory_space<vmem>>, vector<1x512xf32>
    %13 = vector.broadcast %12 : vector<1x512xf32> to vector<16x512xf32>
    %14 = arith.addf %11, %13 : vector<16x512xf32>
    %15 = vector.extract_strided_slice %14 {offsets = [0, 0], sizes = [16, 128], strides = [1, 1]} : vector<16x512xf32> to vector<16x128xf32>
    %16 = math.tanh %15 : vector<16x128xf32>
    %17 = vector.extract_strided_slice %14 {offsets = [0, 128], sizes = [16, 128], strides = [1, 1]} : vector<16x512xf32> to vector<16x128xf32>
    %18 = arith.negf %17 : vector<16x128xf32>
    %19 = math.exp %18 : vector<16x128xf32>
    %cst_14 = arith.constant 1.000000e+00 : f32
    %20 = vector.broadcast %cst_14 : f32 to vector<16x128xf32>
    %21 = arith.addf %20, %19 : vector<16x128xf32>
    %22 = arith.divf %20, %21 : vector<16x128xf32>
    %23 = vector.extract_strided_slice %14 {offsets = [0, 256], sizes = [16, 128], strides = [1, 1]} : vector<16x512xf32> to vector<16x128xf32>
    %24 = arith.negf %23 : vector<16x128xf32>
    %25 = math.exp %24 : vector<16x128xf32>
    %cst_15 = arith.constant 1.000000e+00 : f32
    %26 = vector.broadcast %cst_15 : f32 to vector<16x128xf32>
    %27 = arith.addf %26, %25 : vector<16x128xf32>
    %28 = arith.divf %26, %27 : vector<16x128xf32>
    %29 = vector.extract_strided_slice %14 {offsets = [0, 384], sizes = [16, 128], strides = [1, 1]} : vector<16x512xf32> to vector<16x128xf32>
    %30 = math.tanh %29 : vector<16x128xf32>
    %c0_16 = arith.constant 0 : index
    %c0_17 = arith.constant 0 : index
    %31 = vector.load %arg11[%c0_16, %c0_17] : memref<16x128xf32, #tpu.memory_space<vmem>>, vector<16x128xf32>
    %32 = arith.mulf %31, %28 : vector<16x128xf32>
    %33 = arith.mulf %16, %22 : vector<16x128xf32>
    %34 = arith.addf %32, %33 : vector<16x128xf32>
    %35 = math.tanh %34 : vector<16x128xf32>
    %36 = arith.mulf %35, %30 : vector<16x128xf32>
    %c0_18 = arith.constant 0 : index
    %c0_19 = arith.constant 0 : index
    %37 = vector.load %arg11[%c0_18, %c0_19] : memref<16x128xf32, #tpu.memory_space<vmem>>, vector<16x128xf32>
    tpu.vector_store %arg11[%c0_18, %c0_19], %34 {strides = array<i32>} : memref<16x128xf32, #tpu.memory_space<vmem>>, vector<16x128xf32>,
    %38 = arith.truncf %36 : vector<16x128xf32> to vector<16x128xbf16>
    %c0_20 = arith.constant 0 : index
    %c0_21 = arith.constant 0 : index
    %39 = vector.load %arg10[%c0_20, %c0_21] : memref<16x128xbf16, #tpu.memory_space<vmem>>, vector<16x128xbf16>
    tpu.vector_store %arg10[%c0_20, %c0_21], %38 {strides = array<i32>} : memref<16x128xbf16, #tpu.memory_space<vmem>>, vector<16x128xbf16>,
    %c0_22 = arith.constant 0 : index
    %c0_23 = arith.constant 0 : index
    %c0_24 = arith.constant 0 : index
    %40 = vector.load %arg7[%c0_22, %c0_23, %c0_24] : memref<1x16x128xf32, #tpu.memory_space<vmem>>, vector<1x16x128xf32>
    %41 = vector.shape_cast %40 : vector<1x16x128xf32> to vector<16x128xf32>
    %42 = vector.shape_cast %36 : vector<16x128xf32> to vector<1x16x128xf32>
    tpu.vector_store %arg7[%c0_22, %c0_23, %c0_24], %42 {strides = array<i32>} : memref<1x16x128xf32, #tpu.memory_space<vmem>>, vector<1x16x128xf32>,
    %c0_25 = arith.constant 0 : index
    %c0_26 = arith.constant 0 : index
    %c0_27 = arith.constant 0 : index
    %43 = vector.load %arg8[%c0_25, %c0_26, %c0_27] : memref<1x16x128xf32, #tpu.memory_space<vmem>>, vector<1x16x128xf32>
    %44 = vector.shape_cast %43 : vector<1x16x128xf32> to vector<16x128xf32>
    %45 = vector.shape_cast %34 : vector<16x128xf32> to vector<1x16x128xf32>
    tpu.vector_store %arg8[%c0_25, %c0_26, %c0_27], %45 {strides = array<i32>} : memref<1x16x128xf32, #tpu.memory_space<vmem>>, vector<1x16x128xf32>,
    return
  }
  func.func @transform_0(%arg0: i32, %arg1: i32) -> (i32, i32, i32) {
    %c0_i32 = arith.constant 0 : i32
    %c0_i32_0 = arith.constant 0 : i32
    return %arg1, %arg0, %c0_i32 : i32, i32, i32
  }
  func.func @transform_1(%arg0: i32, %arg1: i32) -> (i32, i32) {
    %c0_i32 = arith.constant 0 : i32
    %c0_i32_0 = arith.constant 0 : i32
    return %arg0, %c0_i32 : i32, i32
  }
  func.func @transform_2(%arg0: i32, %arg1: i32) -> (i32, i32) {
    %c0_i32 = arith.constant 0 : i32
    %c0_i32_0 = arith.constant 0 : i32
    return %arg0, %c0_i32 : i32, i32
  }
  func.func @transform_3(%arg0: i32, %arg1: i32) -> (i32, i32) {
    %c0_i32 = arith.constant 0 : i32
    %c0_i32_0 = arith.constant 0 : i32
    %c0_i32_1 = arith.constant 0 : i32
    return %c0_i32, %c0_i32_0 : i32, i32
  }
  func.func @transform_4(%arg0: i32, %arg1: i32) -> (i32, i32) {
    %c0_i32 = arith.constant 0 : i32
    %c0_i32_0 = arith.constant 0 : i32
    %c0_i32_1 = arith.constant 0 : i32
    return %c0_i32, %c0_i32_0 : i32, i32
  }
  func.func @transform_5(%arg0: i32, %arg1: i32) -> (i32, i32, i32) {
    %c0_i32 = arith.constant 0 : i32
    %c0_i32_0 = arith.constant 0 : i32
    return %arg1, %arg0, %c0_i32 : i32, i32, i32
  }
  func.func @transform_6(%arg0: i32, %arg1: i32) -> (i32, i32, i32) {
    %c0_i32 = arith.constant 0 : i32
    %c0_i32_0 = arith.constant 0 : i32
    return %arg1, %arg0, %c0_i32 : i32, i32, i32
  }
}

module attributes {stable_mosaic.version = 11 : i64} {
  func.func @_lstm_seq_kernel(%arg0: i32, %arg1: i32, %arg2: memref<1x16x32xf32, #tpu.memory_space<vmem>>, %arg3: memref<16x128xf32, #tpu.memory_space<vmem>>, %arg4: memref<16x128xf32, #tpu.memory_space<vmem>>, %arg5: memref<256x512xbf16, #tpu.memory_space<vmem>>, %arg6: memref<1x512xf32, #tpu.memory_space<vmem>>, %arg7: memref<1x16x128xf32, #tpu.memory_space<vmem>>, %arg8: memref<1x16x128xf32, #tpu.memory_space<vmem>>, %arg9: memref<16x256xbf16, #tpu.memory_space<vmem>>, %arg10: memref<16x128xbf16, #tpu.memory_space<vmem>>, %arg11: memref<16x128xf32, #tpu.memory_space<vmem>>) attributes {dimension_semantics = [#tpu.dimension_semantics<parallel>, #tpu.dimension_semantics<arbitrary>], iteration_bounds = array<i64: 1, 1>, scalar_prefetch = 0 : i64, scratch_operands = 3 : i64, tpu.core_type = #tpu.core_type<tc>, window_params = [{transform_indices = @transform_0, window_bounds = array<i64: 1, 16, 32>}, {transform_indices = @transform_1, window_bounds = array<i64: 16, 128>}, {transform_indices = @transform_2, window_bounds = array<i64: 16, 128>}, {pipeline_mode = #tpu.pipeline_mode<synchronous>, transform_indices = @transform_3, window_bounds = array<i64: 256, 512>}, {pipeline_mode = #tpu.pipeline_mode<synchronous>, transform_indices = @transform_4, window_bounds = array<i64: 1, 512>}, {transform_indices = @transform_5, window_bounds = array<i64: 1, 16, 128>}, {transform_indices = @transform_6, window_bounds = array<i64: 1, 16, 128>}]} {
    %c0_i32 = arith.constant 0 : i32
    %0 = arith.cmpi eq, %arg1, %c0_i32 : i32
    %1 = arith.extui %0 : i1 to i32
    %c0_i32_0 = arith.constant 0 : i32
    %2 = arith.cmpi ne, %1, %c0_i32_0 : i32
    scf.if %2 {
      %cst_28 = arith.constant 0.000000e+00 : bf16
      %46 = vector.broadcast %cst_28 : bf16 to vector<16x256xbf16>
      %c0_29 = arith.constant 0 : index
      %c0_30 = arith.constant 0 : index
      %47 = vector.load %arg9[%c0_29, %c0_30] : memref<16x256xbf16, #tpu.memory_space<vmem>>, vector<16x256xbf16>
      tpu.vector_store %arg9[%c0_29, %c0_30], %46 {strides = array<i32>} : memref<16x256xbf16, #tpu.memory_space<vmem>>, vector<16x256xbf16>,
      %c0_31 = arith.constant 0 : index
      %c0_32 = arith.constant 0 : index
      %48 = vector.load %arg3[%c0_31, %c0_32] : memref<16x128xf32, #tpu.memory_space<vmem>>, vector<16x128xf32>
      %49 = arith.truncf %48 : vector<16x128xf32> to vector<16x128xbf16>
      %c0_33 = arith.constant 0 : index
      %c0_34 = arith.constant 0 : index
      %50 = vector.load %arg10[%c0_33, %c0_34] : memref<16x128xbf16, #tpu.memory_space<vmem>>, vector<16x128xbf16>
      tpu.vector_store %arg10[%c0_33, %c0_34], %49 {strides = array<i32>} : memref<16x128xbf16, #tpu.memory_space<vmem>>, vector<16x128xbf16>,
      %c0_35 = arith.constant 0 : index
      %c0_36 = arith.constant 0 : index
      %51 = vector.load %arg4[%c0_35, %c0_36] : memref<16x128xf32, #tpu.memory_space<vmem>>, vector<16x128xf32>
      %c0_37 = arith.constant 0 : index
      %c0_38 = arith.constant 0 : index
      %52 = vector.load %arg11[%c0_37, %c0_38] : memref<16x128xf32, #tpu.memory_space<vmem>>, vector<16x128xf32>
      tpu.vector_store %arg11[%c0_37, %c0_38], %51 {strides = array<i32>} : memref<16x128xf32, #tpu.memory_space<vmem>>, vector<16x128xf32>,
    } else {
    }
    %c0 = arith.constant 0 : index
    %c0_1 = arith.constant 0 : index
    %c0_2 = arith.constant 0 : index
    %3 = vector.load %arg2[%c0, %c0_1, %c0_2] : memref<1x16x32xf32, #tpu.memory_space<vmem>>, vector<1x16x32xf32>
    %4 = vector.shape_cast %3 : vector<1x16x32xf32> to vector<16x32xf32>
    %5 = arith.truncf %4 : vector<16x32xf32> to vector<16x32xbf16>
    %c0_3 = arith.constant 0 : index
    %c0_4 = arith.constant 0 : index
    %6 = vector.load %arg9[%c0_3, %c0_4] : memref<16x256xbf16, #tpu.memory_space<vmem>>, vector<16x32xbf16>
    tpu.vector_store %arg9[%c0_3, %c0_4], %5 {strides = array<i32>} : memref<16x256xbf16, #tpu.memory_space<vmem>>, vector<16x32xbf16>,
    %c0_5 = arith.constant 0 : index
    %c0_6 = arith.constant 0 : index
    %7 = vector.load %arg10[%c0_5, %c0_6] : memref<16x128xbf16, #tpu.memory_space<vmem>>, vector<16x128xbf16>
    %c0_7 = arith.constant 0 : index
    %c128 = arith.constant 128 : index
    %8 = vector.load %arg9[%c0_7, %c128] : memref<16x256xbf16, #tpu.memory_space<vmem>>, vector<16x128xbf16>
    tpu.vector_store %arg9[%c0_7, %c128], %7 {strides = array<i32>} : memref<16x256xbf16, #tpu.memory_space<vmem>>, vector<16x128xbf16>,
    %c0_8 = arith.constant 0 : index
    %c0_9 = arith.constant 0 : index
    %9 = vector.load %arg9[%c0_8, %c0_9] : memref<16x256xbf16, #tpu.memory_space<vmem>>, vector<16x256xbf16>
    %c0_10 = arith.constant 0 : index
    %c0_11 = arith.constant 0 : index
    %10 = vector.load %arg5[%c0_10, %c0_11] : memref<256x512xbf16, #tpu.memory_space<vmem>>, vector<256x512xbf16>
    %cst = arith.constant dense<0.000000e+00> : vector<16x512xf32>
    %11 = tpu.matmul %9, %10, %cst {dimension_numbers = #tpu.dot_dimension_numbers<[1], [0], [0], [1], [0, 0, 1, 1], [], []>} : vector<16x256xbf16>, vector<256x512xbf16>, vector<16x512xf32> -> vector<16x512xf32>
    %c0_12 = arith.constant 0 : index
    %c0_13 = arith.constant 0 : index
    %12 = vector.load %arg6[%c0_12, %c0_13] : memref<1x512xf32, #tpu.memory_space<vmem>>, vector<1x512xf32>
    %13 = vector.broadcast %12 : vector<1x512xf32> to vector<16x512xf32>
    %14 = arith.addf %11, %13 : vector<16x512xf32>
    %15 = vector.extract_strided_slice %14 {offsets = [0, 0], sizes = [16, 128], strides = [1, 1]} : vector<16x512xf32> to vector<16x128xf32>
    %16 = math.tanh %15 : vector<16x128xf32>
    %17 = vector.extract_strided_slice %14 {offsets = [0, 128], sizes = [16, 128], strides = [1, 1]} : vector<16x512xf32> to vector<16x128xf32>
    %18 = arith.negf %17 : vector<16x128xf32>
    %19 = math.exp %18 : vector<16x128xf32>
    %cst_14 = arith.constant 1.000000e+00 : f32
    %20 = vector.broadcast %cst_14 : f32 to vector<16x128xf32>
    %21 = arith.addf %20, %19 : vector<16x128xf32>
    %22 = arith.divf %20, %21 : vector<16x128xf32>
    %23 = vector.extract_strided_slice %14 {offsets = [0, 256], sizes = [16, 128], strides = [1, 1]} : vector<16x512xf32> to vector<16x128xf32>
    %24 = arith.negf %23 : vector<16x128xf32>
    %25 = math.exp %24 : vector<16x128xf32>
    %cst_15 = arith.constant 1.000000e+00 : f32
    %26 = vector.broadcast %cst_15 : f32 to vector<16x128xf32>
    %27 = arith.addf %26, %25 : vector<16x128xf32>
    %28 = arith.divf %26, %27 : vector<16x128xf32>
    %29 = vector.extract_strided_slice %14 {offsets = [0, 384], sizes = [16, 128], strides = [1, 1]} : vector<16x512xf32> to vector<16x128xf32>
    %30 = math.tanh %29 : vector<16x128xf32>
    %c0_16 = arith.constant 0 : index
    %c0_17 = arith.constant 0 : index
    %31 = vector.load %arg11[%c0_16, %c0_17] : memref<16x128xf32, #tpu.memory_space<vmem>>, vector<16x128xf32>
    %32 = arith.mulf %31, %28 : vector<16x128xf32>
    %33 = arith.mulf %16, %22 : vector<16x128xf32>
    %34 = arith.addf %32, %33 : vector<16x128xf32>
    %35 = math.tanh %34 : vector<16x128xf32>
    %36 = arith.mulf %35, %30 : vector<16x128xf32>
    %c0_18 = arith.constant 0 : index
    %c0_19 = arith.constant 0 : index
    %37 = vector.load %arg11[%c0_18, %c0_19] : memref<16x128xf32, #tpu.memory_space<vmem>>, vector<16x128xf32>
    tpu.vector_store %arg11[%c0_18, %c0_19], %34 {strides = array<i32>} : memref<16x128xf32, #tpu.memory_space<vmem>>, vector<16x128xf32>,
    %38 = arith.truncf %36 : vector<16x128xf32> to vector<16x128xbf16>
    %c0_20 = arith.constant 0 : index
    %c0_21 = arith.constant 0 : index
    %39 = vector.load %arg10[%c0_20, %c0_21] : memref<16x128xbf16, #tpu.memory_space<vmem>>, vector<16x128xbf16>
    tpu.vector_store %arg10[%c0_20, %c0_21], %38 {strides = array<i32>} : memref<16x128xbf16, #tpu.memory_space<vmem>>, vector<16x128xbf16>,
    %c0_22 = arith.constant 0 : index
    %c0_23 = arith.constant 0 : index
    %c0_24 = arith.constant 0 : index
    %40 = vector.load %arg7[%c0_22, %c0_23, %c0_24] : memref<1x16x128xf32, #tpu.memory_space<vmem>>, vector<1x16x128xf32>
    %41 = vector.shape_cast %40 : vector<1x16x128xf32> to vector<16x128xf32>
    %42 = vector.shape_cast %36 : vector<16x128xf32> to vector<1x16x128xf32>
    tpu.vector_store %arg7[%c0_22, %c0_23, %c0_24], %42 {strides = array<i32>} : memref<1x16x128xf32, #tpu.memory_space<vmem>>, vector<1x16x128xf32>,
    %c0_25 = arith.constant 0 : index
    %c0_26 = arith.constant 0 : index
    %c0_27 = arith.constant 0 : index
    %43 = vector.load %arg8[%c0_25, %c0_26, %c0_27] : memref<1x16x128xf32, #tpu.memory_space<vmem>>, vector<1x16x128xf32>
    %44 = vector.shape_cast %43 : vector<1x16x128xf32> to vector<16x128xf32>
    %45 = vector.shape_cast %34 : vector<16x128xf32> to vector<1x16x128xf32>
    tpu.vector_store %arg8[%c0_25, %c0_26, %c0_27], %45 {strides = array<i32>} : memref<1x16x128xf32, #tpu.memory_space<vmem>>, vector<1x16x128xf32>,
    return
  }
  func.func @transform_0(%arg0: i32, %arg1: i32) -> (i32, i32, i32) {
    %c0_i32 = arith.constant 0 : i32
    %c0_i32_0 = arith.constant 0 : i32
    return %arg1, %arg0, %c0_i32 : i32, i32, i32
  }
  func.func @transform_1(%arg0: i32, %arg1: i32) -> (i32, i32) {
    %c0_i32 = arith.constant 0 : i32
    %c0_i32_0 = arith.constant 0 : i32
    return %arg0, %c0_i32 : i32, i32
  }
  func.func @transform_2(%arg0: i32, %arg1: i32) -> (i32, i32) {
    %c0_i32 = arith.constant 0 : i32
    %c0_i32_0 = arith.constant 0 : i32
    return %arg0, %c0_i32 : i32, i32
  }
  func.func @transform_3(%arg0: i32, %arg1: i32) -> (i32, i32) {
    %c0_i32 = arith.constant 0 : i32
    %c0_i32_0 = arith.constant 0 : i32
    %c0_i32_1 = arith.constant 0 : i32
    return %c0_i32, %c0_i32_0 : i32, i32
  }
  func.func @transform_4(%arg0: i32, %arg1: i32) -> (i32, i32) {
    %c0_i32 = arith.constant 0 : i32
    %c0_i32_0 = arith.constant 0 : i32
    %c0_i32_1 = arith.constant 0 : i32
    return %c0_i32, %c0_i32_0 : i32, i32
  }
  func.func @transform_5(%arg0: i32, %arg1: i32) -> (i32, i32, i32) {
    %c0_i32 = arith.constant 0 : i32
    %c0_i32_0 = arith.constant 0 : i32
    return %arg1, %arg0, %c0_i32 : i32, i32, i32
  }
  func.func @transform_6(%arg0: i32, %arg1: i32) -> (i32, i32, i32) {
    %c0_i32 = arith.constant 0 : i32
    %c0_i32_0 = arith.constant 0 : i32
    return %arg1, %arg0, %c0_i32 : i32, i32, i32
  }
}

</mosaic_0001>

<llo_original>
// kernel: tpu_custom_call.1
$region0: #{tpu_custom_call.1}
  #allocation0 [shape = 'u32[]', space=smem, size = 0x4, offset = 0x4, fixed_abs, tag = 'smem constant byte address 0x4 - core index']
  #allocation1 [shape = 'u32[72,128]{1,0:T(1,128)}', space=vmem, size = 0x9000, scoped, tag = 'internal scratch']
  #allocation2 [shape = 'bf16[16,256]{1,0:T(8,128)(2,1)}', space=vmem, size = 0x2000, scoped, tag = 'scratch operand']
  #allocation3 [shape = 'bf16[16,128]{1,0:T(8,128)(2,1)}', space=vmem, size = 0x1000, scoped, tag = 'scratch operand']
  #allocation4 [shape = 'f32[16,128]{1,0:T(8,128)}', space=vmem, size = 0x2000, scoped, tag = 'scratch operand']
  %s0 = inlined_call_operand.hbm [shape: f32[1,8,32], index: 0, kind: input, shape index: {}]
  %s1 = inlined_call_operand.hbm [shape: f32[8,128], index: 1, kind: input, shape index: {}]
  %s2 = inlined_call_operand.hbm [shape: f32[8,128], index: 2, kind: input, shape index: {}]
  %s3 = inlined_call_operand.hbm [shape: bf16[256,512], index: 3, kind: input, shape index: {}]
  %s4 = inlined_call_operand.hbm [shape: f32[1,512], index: 4, kind: input, shape index: {}]
  %s5 = inlined_call_operand.hbm [shape: f32[1,8,128], index: 5, kind: output, shape index: {0}]
  %s6 = inlined_call_operand.hbm [shape: f32[1,8,128], index: 6, kind: output, shape index: {1}]
  %7 = xla_tuple %s5, %s6
  %s8 = sld [smem:[#allocation0]]
  $region62: #{tpu_custom_call.1} parent=0
    _
  %s10 = ssub.s32 1, %s8
  %s11 = scalar_select 0, %s10, %s8
  $region1: #{tpu_custom_call.1} parent=0
    #allocation5 [shape = 'u8[8192]{0}', space=vmem, size = 0x2000, scoped, tag = 'input window, operand 0, single buffered']
    #allocation6 [shape = 's32[1]{0}', space=sflag, size = 0x4, scoped, tag = 'scoped memory for tpu_custom_call.1']
    #allocation7 [shape = 's32[1]{0}', space=sflag, size = 0x4, scoped, tag = 'scoped memory for tpu_custom_call.1']
    #allocation8 [shape = 'u8[8192]{0}', space=vmem, size = 0x2000, scoped, tag = 'input window, operand 1, single buffered']
    #allocation9 [shape = 's32[1]{0}', space=sflag, size = 0x4, scoped, tag = 'scoped memory for tpu_custom_call.1']
    #allocation10 [shape = 'u8[8192]{0}', space=vmem, size = 0x2000, scoped, tag = 'input window, operand 2, single buffered']
    #allocation11 [shape = 'u8[262144]{0}', space=vmem, size = 0x40000, scoped, tag = 'input window, operand 3, single buffered']
    #allocation12 [shape = 's32[1]{0}', space=sflag, size = 0x4, scoped, tag = 'scoped memory for tpu_custom_call.1']
    #allocation13 [shape = 'u8[2048]{0}', space=vmem, size = 0x800, scoped, tag = 'input window, operand 4, single buffered']
    #allocation14 [shape = 'u8[8192]{0}', space=vmem, size = 0x2000, scoped, tag = 'output window, operand 0, single buffered']
    #allocation15 [shape = 'u8[8192]{0}', space=vmem, size = 0x2000, scoped, tag = 'output window, operand 1, single buffered']
    #allocation16 [shape = 's32[1]{0}', space=sflag, size = 0x4, scoped, tag = 'scoped memory for tpu_custom_call.1']
    %12 = vsyncpa [#allocation6], 0
    %13 = vsyncpa [#allocation9], 0
    %14 = vsyncpa [#allocation12], 0
    %15 = vsyncpa [#allocation7], 0
    %16 = vsyncpa [#allocation16], 0
    // Predicated region
    $region2: #{tpu_custom_call.1} parent=1 // pred_check
      _
    $region3: #{tpu_custom_call.1} parent=1 // pred_check_branch
      %18 = sbr.rel (0) target = $region5
    $region4: #{tpu_custom_call.1} parent=1 // pred_region
      %20 = vsyncadd [#allocation6], 128
      %s21 = sshll.u32 %s0, 4
      %s22 = int_to_ptr.hbm [resolvable:$true] %s21
      %s23 = sshll.u32 [#allocation5], 4
      %s24 = int_to_ptr.vmem [resolvable:$true] %s23
      %29 = dma.hbm_to_vmem [thread:$0]  %s22, 128, %s24, [#allocation6], 128, 128, 8
    $region5: #{tpu_custom_call.1} parent=1 // pred_fallthru
      _
    // Predicated region
    $region6: #{tpu_custom_call.1} parent=1 // pred_check
      _
    $region7: #{tpu_custom_call.1} parent=1 // pred_check_branch
      %31 = sbr.rel (0) target = $region9
    $region8: #{tpu_custom_call.1} parent=1 // pred_region
      %33 = vsyncadd [#allocation9], 128
      %s34 = sshll.u32 %s1, 4
      %s35 = int_to_ptr.hbm [resolvable:$true] %s34
      %s36 = sshll.u32 [#allocation8], 4
      %s37 = int_to_ptr.vmem [resolvable:$true] %s36
      %42 = dma.hbm_to_vmem [thread:$0]  %s35, 128, %s37, [#allocation9], 128, 128, 8
    $region9: #{tpu_custom_call.1} parent=1 // pred_fallthru
      _
    // Predicated region
    $region10: #{tpu_custom_call.1} parent=1 // pred_check
      _
    $region11: #{tpu_custom_call.1} parent=1 // pred_check_branch
      %44 = sbr.rel (0) target = $region13
    $region12: #{tpu_custom_call.1} parent=1 // pred_region
      %46 = vsyncadd [#allocation9], 128
      %s47 = sshll.u32 %s2, 4
      %s48 = int_to_ptr.hbm [resolvable:$true] %s47
      %s49 = sshll.u32 [#allocation10], 4
      %s50 = int_to_ptr.vmem [resolvable:$true] %s49
      %55 = dma.hbm_to_vmem [thread:$0]  %s48, 128, %s50, [#allocation9], 128, 128, 8
    $region13: #{tpu_custom_call.1} parent=1 // pred_fallthru
      _
    // Predicated region
    $region14: #{tpu_custom_call.1} parent=1 // pred_check
      _
    $region15: #{tpu_custom_call.1} parent=1 // pred_check_branch
      %57 = sbr.rel (0) target = $region17
    $region16: #{tpu_custom_call.1} parent=1 // pred_region
      %59 = vsyncadd [#allocation12], 0
      %s60 = sshll.u32 %s3, 4
      %s61 = int_to_ptr.hbm [resolvable:$true] %s60
      %s62 = sshll.u32 [#allocation11], 4
      %s63 = int_to_ptr.vmem [resolvable:$true] %s62
      %68 = dma.hbm_to_vmem [thread:$0]  %s61, 8192, %s63, [#allocation12], 256, 256, 16
    $region17: #{tpu_custom_call.1} parent=1 // pred_fallthru
      _
    // Predicated region
    $region18: #{tpu_custom_call.1} parent=1 // pred_check
      _
    $region19: #{tpu_custom_call.1} parent=1 // pred_check_branch
      %70 = sbr.rel (0) target = $region21
    $region20: #{tpu_custom_call.1} parent=1 // pred_region
      %72 = vsyncadd [#allocation12], 0
      %s74 = sshll.u32 %s4, 4
      %s75 = int_to_ptr.hbm [resolvable:$true] %s74
      %s76 = sshll.u32 [#allocation13], 4
      %s77 = int_to_ptr.vmem [resolvable:$true] %s76
      %79 = dma.hbm_to_vmem [thread:$0]  %s75, 64, %s77, [#allocation12]
    $region21: #{tpu_custom_call.1} parent=1 // pred_fallthru
      _
    // Predicated region
    $region22: #{tpu_custom_call.1} parent=1 // pred_check
      _
    $region23: #{tpu_custom_call.1} parent=1 // pred_check_branch
      %81 = sbr.rel (0) target = $region25
    $region24: #{tpu_custom_call.1} parent=1 // pred_region
      %83 = dma.done [#allocation6], 256
    $region25: #{tpu_custom_call.1} parent=1 // pred_fallthru
      _
    // Predicated region
    $region26: #{tpu_custom_call.1} parent=1 // pred_check
      _
    $region27: #{tpu_custom_call.1} parent=1 // pred_check_branch
      %85 = sbr.rel (0) target = $region29
    $region28: #{tpu_custom_call.1} parent=1 // pred_region
      %87 = dma.done [#allocation9], 256
    $region29: #{tpu_custom_call.1} parent=1 // pred_fallthru
      _
    // Predicated region
    $region30: #{tpu_custom_call.1} parent=1 // pred_check
      _
    $region31: #{tpu_custom_call.1} parent=1 // pred_check_branch
      %89 = sbr.rel (0) target = $region33
    $region32: #{tpu_custom_call.1} parent=1 // pred_region
      %91 = dma.done [#allocation9], 256
    $region33: #{tpu_custom_call.1} parent=1 // pred_fallthru
      _
    // Predicated region
    $region34: #{tpu_custom_call.1} parent=1 // pred_check
      _
    $region35: #{tpu_custom_call.1} parent=1 // pred_check_branch
      %93 = sbr.rel (0) target = $region37
    $region36: #{tpu_custom_call.1} parent=1 // pred_region
      %95 = dma.done [#allocation12], 8192
    $region37: #{tpu_custom_call.1} parent=1 // pred_fallthru
      _
    // Predicated region
    $region38: #{tpu_custom_call.1} parent=1 // pred_check
      _
    $region39: #{tpu_custom_call.1} parent=1 // pred_check_branch
      %97 = sbr.rel (0) target = $region41
    $region40: #{tpu_custom_call.1} parent=1 // pred_region
      %99 = dma.done [#allocation12], 64
    $region41: #{tpu_custom_call.1} parent=1 // pred_fallthru
      _
    %p101 = scmp.eq.s32.totalorder 0, 0
    // Predicated region
    $region42: #{tpu_custom_call.1} parent=1 // pred_check
      %p102 = pneg %p101
    $region43: #{tpu_custom_call.1} parent=1 // pred_check_branch
      %104 = sbr.rel (%p102) target = $region45
    $region44: #{tpu_custom_call.1} parent=1 // pred_region
      %105 = vst [vmem:[#allocation2] sm:$0xff] 0
      %106 = vst [vmem:[#allocation2 + $0x8] sm:$0xff] 0
      %v107 = vld [vmem:[#allocation8] sm:$0xff]
      %v108 = vld [vmem:[#allocation8 + $0x8] sm:$0xff]
      %v109 = vpack.c.bf16 %v107, %v107
      %v110 = vpack.c.bf16 %v108, %v108
      %111 = vst [vmem:[#allocation3] sm:$0xf] %v109
      %112 = vst [vmem:[#allocation3 + $0x4] sm:$0xf] %v110
      %v113 = vld [vmem:[#allocation10] sm:$0xff]
      %v114 = vld [vmem:[#allocation10 + $0x8] sm:$0xff]
      %115 = vst [vmem:[#allocation4] sm:$0xff] %v113
      %116 = vst [vmem:[#allocation4 + $0x8] sm:$0xff] %v114
    $region45: #{tpu_custom_call.1} parent=1 // pred_fallthru
      _
    %v117 = vld [vmem:[#allocation5] sm:$0xff]
    %v118 = vld [vmem:[#allocation5 + $0x8] sm:$0xff]
    %v119 = vpack.c.bf16 %v117, %v117
    %v120 = vpack.c.bf16 %v118, %v118
    %vm121 = vcmask 257024
    %122 = vst.msk [vmem:[#allocation2] sm:$0xf] %vm121, %v119
    %123 = vst.msk [vmem:[#allocation2 + $0x8] sm:$0xf] %vm121, %v120
    %v124 = vld [vmem:[#allocation3] sm:$0xf]
    %v125 = vld [vmem:[#allocation3 + $0x4] sm:$0xf]
    %126 = vst [vmem:[#allocation2 + $0x4] sm:$0xf] %v124
    %127 = vst [vmem:[#allocation2 + $0xc] sm:$0xf] %v125
    %v128 = vld [vmem:[#allocation2] sm:$0xff]
    %v129 = vld [vmem:[#allocation2 + $0x8] sm:$0xff]
    %v130 = vld [vmem:[#allocation11] sm:$0xff]
    %v131 = vld [vmem:[#allocation11 + $0x8] sm:$0xff]
    %v132 = vld [vmem:[#allocation11 + $0x10] sm:$0xff]
    %v133 = vld [vmem:[#allocation11 + $0x18] sm:$0xff]
    %v134 = vld [vmem:[#allocation11 + $0x20] sm:$0xff]
    %v135 = vld [vmem:[#allocation11 + $0x28] sm:$0xff]
    %v136 = vld [vmem:[#allocation11 + $0x30] sm:$0xff]
    %v137 = vld [vmem:[#allocation11 + $0x38] sm:$0xff]
    %v138 = vld [vmem:[#allocation11 + $0x40] sm:$0xff]
    %v139 = vld [vmem:[#allocation11 + $0x48] sm:$0xff]
    %v140 = vld [vmem:[#allocation11 + $0x50] sm:$0xff]
    %v141 = vld [vmem:[#allocation11 + $0x58] sm:$0xff]
    %v142 = vld [vmem:[#allocation11 + $0x60] sm:$0xff]
    %v143 = vld [vmem:[#allocation11 + $0x68] sm:$0xff]
    %v144 = vld [vmem:[#allocation11 + $0x70] sm:$0xff]
    %v145 = vld [vmem:[#allocation11 + $0x78] sm:$0xff]
    %v146 = vld [vmem:[#allocation11 + $0x80] sm:$0xff]
    %v147 = vld [vmem:[#allocation11 + $0x88] sm:$0xff]
    %v148 = vld [vmem:[#allocation11 + $0x90] sm:$0xff]
    %v149 = vld [vmem:[#allocation11 + $0x98] sm:$0xff]
    %v150 = vld [vmem:[#allocation11 + $0xa0] sm:$0xff]
    %v151 = vld [vmem:[#allocation11 + $0xa8] sm:$0xff]
    %v152 = vld [vmem:[#allocation11 + $0xb0] sm:$0xff]
    %v153 = vld [vmem:[#allocation11 + $0xb8] sm:$0xff]
    %v154 = vld [vmem:[#allocation11 + $0xc0] sm:$0xff]
    %v155 = vld [vmem:[#allocation11 + $0xc8] sm:$0xff]
    %v156 = vld [vmem:[#allocation11 + $0xd0] sm:$0xff]
    %v157 = vld [vmem:[#allocation11 + $0xd8] sm:$0xff]
    %v158 = vld [vmem:[#allocation11 + $0xe0] sm:$0xff]
    %v159 = vld [vmem:[#allocation11 + $0xe8] sm:$0xff]
    %v160 = vld [vmem:[#allocation11 + $0xf0] sm:$0xff]
    %v161 = vld [vmem:[#allocation11 + $0xf8] sm:$0xff]
    %v162 = vld [vmem:[#allocation11 + $0x100] sm:$0xff]
    %v163 = vld [vmem:[#allocation11 + $0x108] sm:$0xff]
    %v164 = vld [vmem:[#allocation11 + $0x110] sm:$0xff]
    %v165 = vld [vmem:[#allocation11 + $0x118] sm:$0xff]
    %v166 = vld [vmem:[#allocation11 + $0x120] sm:$0xff]
    %v167 = vld [vmem:[#allocation11 + $0x128] sm:$0xff]
    %v168 = vld [vmem:[#allocation11 + $0x130] sm:$0xff]
    %v169 = vld [vmem:[#allocation11 + $0x138] sm:$0xff]
    %v170 = vld [vmem:[#allocation11 + $0x140] sm:$0xff]
    %v171 = vld [vmem:[#allocation11 + $0x148] sm:$0xff]
    %v172 = vld [vmem:[#allocation11 + $0x150] sm:$0xff]
    %v173 = vld [vmem:[#allocation11 + $0x158] sm:$0xff]
    %v174 = vld [vmem:[#allocation11 + $0x160] sm:$0xff]
    %v175 = vld [vmem:[#allocation11 + $0x168] sm:$0xff]
    %v176 = vld [vmem:[#allocation11 + $0x170] sm:$0xff]
    %v177 = vld [vmem:[#allocation11 + $0x178] sm:$0xff]
    %v178 = vld [vmem:[#allocation11 + $0x180] sm:$0xff]
    %v179 = vld [vmem:[#allocation11 + $0x188] sm:$0xff]
    %v180 = vld [vmem:[#allocation11 + $0x190] sm:$0xff]
    %v181 = vld [vmem:[#allocation11 + $0x198] sm:$0xff]
    %v182 = vld [vmem:[#allocation11 + $0x1a0] sm:$0xff]
    %v183 = vld [vmem:[#allocation11 + $0x1a8] sm:$0xff]
    %v184 = vld [vmem:[#allocation11 + $0x1b0] sm:$0xff]
    %v185 = vld [vmem:[#allocation11 + $0x1b8] sm:$0xff]
    %v186 = vld [vmem:[#allocation11 + $0x1c0] sm:$0xff]
    %v187 = vld [vmem:[#allocation11 + $0x1c8] sm:$0xff]
    %v188 = vld [vmem:[#allocation11 + $0x1d0] sm:$0xff]
    %v189 = vld [vmem:[#allocation11 + $0x1d8] sm:$0xff]
    %v190 = vld [vmem:[#allocation11 + $0x1e0] sm:$0xff]
    %v191 = vld [vmem:[#allocation11 + $0x1e8] sm:$0xff]
    %v192 = vld [vmem:[#allocation11 + $0x1f0] sm:$0xff]
    %v193 = vld [vmem:[#allocation11 + $0x1f8] sm:$0xff]
    %v194 = vld [vmem:[#allocation13] sm:$0xf]
    %v196 = vperm.slane %v194, 0
    %v197 = vperm.slane %v194, 1
    %v198 = vperm.slane %v194, 2
    %v199 = vperm.slane %v194, 3
    %v206 = vunpack.c.l.b16 %v128
    %v207 = vunpack.c.h.b16 %v128
    %v208 = vunpack.c.l.b16 %v129
    %v209 = vunpack.c.h.b16 %v129
    %v210 = vpack.c.b16 %v208, %v206
    %v211 = vpack.c.b16 %v209, %v207
    %v278 = vunpack.c.l.b16 %v130
    %v279 = vunpack.c.h.b16 %v130
    %v280 = vunpack.c.l.b16 %v131
    %v281 = vunpack.c.h.b16 %v131
    %v282 = vunpack.c.l.b16 %v132
    %v283 = vunpack.c.h.b16 %v132
    %v284 = vunpack.c.l.b16 %v133
    %v285 = vunpack.c.h.b16 %v133
    %v286 = vunpack.c.l.b16 %v134
    %v287 = vunpack.c.h.b16 %v134
    %v288 = vunpack.c.l.b16 %v135
    %v289 = vunpack.c.h.b16 %v135
    %v290 = vunpack.c.l.b16 %v136
    %v291 = vunpack.c.h.b16 %v136
    %v292 = vunpack.c.l.b16 %v137
    %v293 = vunpack.c.h.b16 %v137
    %v294 = vunpack.c.l.b16 %v138
    %v295 = vunpack.c.h.b16 %v138
    %v296 = vunpack.c.l.b16 %v139
    %v297 = vunpack.c.h.b16 %v139
    %v298 = vunpack.c.l.b16 %v140
    %v299 = vunpack.c.h.b16 %v140
    %v300 = vunpack.c.l.b16 %v141
    %v301 = vunpack.c.h.b16 %v141
    %v302 = vunpack.c.l.b16 %v142
    %v303 = vunpack.c.h.b16 %v142
    %v304 = vunpack.c.l.b16 %v143
    %v305 = vunpack.c.h.b16 %v143
    %v306 = vunpack.c.l.b16 %v144
    %v307 = vunpack.c.h.b16 %v144
    %v308 = vunpack.c.l.b16 %v145
    %v309 = vunpack.c.h.b16 %v145
    %v310 = vunpack.c.l.b16 %v146
    %v311 = vunpack.c.h.b16 %v146
    %v312 = vunpack.c.l.b16 %v147
    %v313 = vunpack.c.h.b16 %v147
    %v314 = vunpack.c.l.b16 %v148
    %v315 = vunpack.c.h.b16 %v148
    %v316 = vunpack.c.l.b16 %v149
    %v317 = vunpack.c.h.b16 %v149
    %v318 = vunpack.c.l.b16 %v150
    %v319 = vunpack.c.h.b16 %v150
    %v320 = vunpack.c.l.b16 %v151
    %v321 = vunpack.c.h.b16 %v151
    %v322 = vunpack.c.l.b16 %v152
    %v323 = vunpack.c.h.b16 %v152
    %v324 = vunpack.c.l.b16 %v153
    %v325 = vunpack.c.h.b16 %v153
    %v326 = vunpack.c.l.b16 %v154
    %v327 = vunpack.c.h.b16 %v154
    %v328 = vunpack.c.l.b16 %v155
    %v329 = vunpack.c.h.b16 %v155
    %v330 = vunpack.c.l.b16 %v156
    %v331 = vunpack.c.h.b16 %v156
    %v332 = vunpack.c.l.b16 %v157
    %v333 = vunpack.c.h.b16 %v157
    %v334 = vunpack.c.l.b16 %v158
    %v335 = vunpack.c.h.b16 %v158
    %v336 = vunpack.c.l.b16 %v159
    %v337 = vunpack.c.h.b16 %v159
    %v338 = vunpack.c.l.b16 %v160
    %v339 = vunpack.c.h.b16 %v160
    %v340 = vunpack.c.l.b16 %v161
    %v341 = vunpack.c.h.b16 %v161
    %v342 = vunpack.c.l.b16 %v162
    %v343 = vunpack.c.h.b16 %v162
    %v344 = vunpack.c.l.b16 %v163
    %v345 = vunpack.c.h.b16 %v163
    %v346 = vunpack.c.l.b16 %v164
    %v347 = vunpack.c.h.b16 %v164
    %v348 = vunpack.c.l.b16 %v165
    %v349 = vunpack.c.h.b16 %v165
    %v350 = vunpack.c.l.b16 %v166
    %v351 = vunpack.c.h.b16 %v166
    %v352 = vunpack.c.l.b16 %v167
    %v353 = vunpack.c.h.b16 %v167
    %v354 = vunpack.c.l.b16 %v168
    %v355 = vunpack.c.h.b16 %v168
    %v356 = vunpack.c.l.b16 %v169
    %v357 = vunpack.c.h.b16 %v169
    %v358 = vunpack.c.l.b16 %v170
    %v359 = vunpack.c.h.b16 %v170
    %v360 = vunpack.c.l.b16 %v171
    %v361 = vunpack.c.h.b16 %v171
    %v362 = vunpack.c.l.b16 %v172
    %v363 = vunpack.c.h.b16 %v172
    %v364 = vunpack.c.l.b16 %v173
    %v365 = vunpack.c.h.b16 %v173
    %v366 = vunpack.c.l.b16 %v174
    %v367 = vunpack.c.h.b16 %v174
    %v368 = vunpack.c.l.b16 %v175
    %v369 = vunpack.c.h.b16 %v175
    %v370 = vunpack.c.l.b16 %v176
    %v371 = vunpack.c.h.b16 %v176
    %v372 = vunpack.c.l.b16 %v177
    %v373 = vunpack.c.h.b16 %v177
    %v374 = vunpack.c.l.b16 %v178
    %v375 = vunpack.c.h.b16 %v178
    %v376 = vunpack.c.l.b16 %v179
    %v377 = vunpack.c.h.b16 %v179
    %v378 = vunpack.c.l.b16 %v180
    %v379 = vunpack.c.h.b16 %v180
    %v380 = vunpack.c.l.b16 %v181
    %v381 = vunpack.c.h.b16 %v181
    %v382 = vunpack.c.l.b16 %v182
    %v383 = vunpack.c.h.b16 %v182
    %v384 = vunpack.c.l.b16 %v183
    %v385 = vunpack.c.h.b16 %v183
    %v386 = vunpack.c.l.b16 %v184
    %v387 = vunpack.c.h.b16 %v184
    %v388 = vunpack.c.l.b16 %v185
    %v389 = vunpack.c.h.b16 %v185
    %v390 = vunpack.c.l.b16 %v186
    %v391 = vunpack.c.h.b16 %v186
    %v392 = vunpack.c.l.b16 %v187
    %v393 = vunpack.c.h.b16 %v187
    %v394 = vunpack.c.l.b16 %v188
    %v395 = vunpack.c.h.b16 %v188
    %v396 = vunpack.c.l.b16 %v189
    %v397 = vunpack.c.h.b16 %v189
    %v398 = vunpack.c.l.b16 %v190
    %v399 = vunpack.c.h.b16 %v190
    %v400 = vunpack.c.l.b16 %v191
    %v401 = vunpack.c.h.b16 %v191
    %v402 = vunpack.c.l.b16 %v192
    %v403 = vunpack.c.h.b16 %v192
    %v404 = vunpack.c.l.b16 %v193
    %v405 = vunpack.c.h.b16 %v193
    %v406 = vpack.c.b16 %v282, %v278
    %v407 = vpack.c.b16 %v283, %v279
    %v408 = vpack.c.b16 %v284, %v280
    %v409 = vpack.c.b16 %v285, %v281
    %v410 = vpack.c.b16 %v290, %v286
    %v411 = vpack.c.b16 %v291, %v287
    %v412 = vpack.c.b16 %v292, %v288
    %v413 = vpack.c.b16 %v293, %v289
    %v414 = vpack.c.b16 %v298, %v294
    %v415 = vpack.c.b16 %v299, %v295
    %v416 = vpack.c.b16 %v300, %v296
    %v417 = vpack.c.b16 %v301, %v297
    %v418 = vpack.c.b16 %v306, %v302
    %v419 = vpack.c.b16 %v307, %v303
    %v420 = vpack.c.b16 %v308, %v304
    %v421 = vpack.c.b16 %v309, %v305
    %v422 = vpack.c.b16 %v314, %v310
    %v423 = vpack.c.b16 %v315, %v311
    %v424 = vpack.c.b16 %v316, %v312
    %v425 = vpack.c.b16 %v317, %v313
    %v426 = vpack.c.b16 %v322, %v318
    %v427 = vpack.c.b16 %v323, %v319
    %v428 = vpack.c.b16 %v324, %v320
    %v429 = vpack.c.b16 %v325, %v321
    %v430 = vpack.c.b16 %v330, %v326
    %v431 = vpack.c.b16 %v331, %v327
    %v432 = vpack.c.b16 %v332, %v328
    %v433 = vpack.c.b16 %v333, %v329
    %v434 = vpack.c.b16 %v338, %v334
    %v435 = vpack.c.b16 %v339, %v335
    %v436 = vpack.c.b16 %v340, %v336
    %v437 = vpack.c.b16 %v341, %v337
    %v438 = vpack.c.b16 %v346, %v342
    %v439 = vpack.c.b16 %v347, %v343
    %v440 = vpack.c.b16 %v348, %v344
    %v441 = vpack.c.b16 %v349, %v345
    %v442 = vpack.c.b16 %v354, %v350
    %v443 = vpack.c.b16 %v355, %v351
    %v444 = vpack.c.b16 %v356, %v352
    %v445 = vpack.c.b16 %v357, %v353
    %v446 = vpack.c.b16 %v362, %v358
    %v447 = vpack.c.b16 %v363, %v359
    %v448 = vpack.c.b16 %v364, %v360
    %v449 = vpack.c.b16 %v365, %v361
    %v450 = vpack.c.b16 %v370, %v366
    %v451 = vpack.c.b16 %v371, %v367
    %v452 = vpack.c.b16 %v372, %v368
    %v453 = vpack.c.b16 %v373, %v369
    %v454 = vpack.c.b16 %v378, %v374
    %v455 = vpack.c.b16 %v379, %v375
    %v456 = vpack.c.b16 %v380, %v376
    %v457 = vpack.c.b16 %v381, %v377
    %v458 = vpack.c.b16 %v386, %v382
    %v459 = vpack.c.b16 %v387, %v383
    %v460 = vpack.c.b16 %v388, %v384
    %v461 = vpack.c.b16 %v389, %v385
    %v462 = vpack.c.b16 %v394, %v390
    %v463 = vpack.c.b16 %v395, %v391
    %v464 = vpack.c.b16 %v396, %v392
    %v465 = vpack.c.b16 %v397, %v393
    %v466 = vpack.c.b16 %v402, %v398
    %v467 = vpack.c.b16 %v403, %v399
    %v468 = vpack.c.b16 %v404, %v400
    %v469 = vpack.c.b16 %v405, %v401
    %534 = vmatpush.bf16.msra.mxu0 %v434
    %535 = vmatpush.bf16.msra.mxu0 %v430
    %536 = vmatpush.bf16.msra.mxu0 %v426
    %537 = vmatpush.bf16.msra.mxu0 %v422
    %538 = vmatpush.bf16.msra.mxu0 %v418
    %539 = vmatpush.bf16.msra.mxu0 %v414
    %540 = vmatpush.bf16.msra.mxu0 %v410
    %541 = vmatpush.bf16.msra.mxu0 %v406
    %542 = vmatmul.bf16.gmra.mxu0 %v210
    %v543 = vpop.f32.mrf.mxu0
    %v544 = vadd.f32 %v196, %v543
    %v545 = vpop.f32.mrf.mxu0
    %v546 = vadd.f32 %v196, %v545
    %547 = vdwg.mxu0
    %548 = vmatpush.bf16.msra.mxu0 %v466
    %549 = vmatpush.bf16.msra.mxu0 %v462
    %550 = vmatpush.bf16.msra.mxu0 %v458
    %551 = vmatpush.bf16.msra.mxu0 %v454
    %552 = vmatpush.bf16.msra.mxu0 %v450
    %553 = vmatpush.bf16.msra.mxu0 %v446
    %554 = vmatpush.bf16.msra.mxu0 %v442
    %555 = vmatpush.bf16.msra.mxu0 %v438
    %556 = vmatmul.bf16.gmra.mxu0 %v211
    %v557 = vpop.f32.mrf.mxu0
    %v558 = vadd.f32 %v544, %v557
    %v559 = vpop.f32.mrf.mxu0
    %v560 = vadd.f32 %v546, %v559
    %561 = vdwg.mxu0
    %562 = vmatpush.bf16.msra.mxu0 %v435
    %563 = vmatpush.bf16.msra.mxu0 %v431
    %564 = vmatpush.bf16.msra.mxu0 %v427
    %565 = vmatpush.bf16.msra.mxu0 %v423
    %566 = vmatpush.bf16.msra.mxu0 %v419
    %567 = vmatpush.bf16.msra.mxu0 %v415
    %568 = vmatpush.bf16.msra.mxu0 %v411
    %569 = vmatpush.bf16.msra.mxu0 %v407
    %570 = vmatmul.bf16.gmra.mxu0 %v210
    %v571 = vpop.f32.mrf.mxu0
    %v572 = vadd.f32 %v197, %v571
    %v573 = vpop.f32.mrf.mxu0
    %v574 = vadd.f32 %v197, %v573
    %575 = vdwg.mxu0
    %576 = vmatpush.bf16.msra.mxu0 %v467
    %577 = vmatpush.bf16.msra.mxu0 %v463
    %578 = vmatpush.bf16.msra.mxu0 %v459
    %579 = vmatpush.bf16.msra.mxu0 %v455
    %580 = vmatpush.bf16.msra.mxu0 %v451
    %581 = vmatpush.bf16.msra.mxu0 %v447
    %582 = vmatpush.bf16.msra.mxu0 %v443
    %583 = vmatpush.bf16.msra.mxu0 %v439
    %584 = vmatmul.bf16.gmra.mxu0 %v211
    %v585 = vpop.f32.mrf.mxu0
    %v586 = vadd.f32 %v572, %v585
    %v587 = vpop.f32.mrf.mxu0
    %v588 = vadd.f32 %v574, %v587
    %589 = vdwg.mxu0
    %590 = vmatpush.bf16.msra.mxu0 %v436
    %591 = vmatpush.bf16.msra.mxu0 %v432
    %592 = vmatpush.bf16.msra.mxu0 %v428
    %593 = vmatpush.bf16.msra.mxu0 %v424
    %594 = vmatpush.bf16.msra.mxu0 %v420
    %595 = vmatpush.bf16.msra.mxu0 %v416
    %596 = vmatpush.bf16.msra.mxu0 %v412
    %597 = vmatpush.bf16.msra.mxu0 %v408
    %598 = vmatmul.bf16.gmra.mxu0 %v210
    %v599 = vpop.f32.mrf.mxu0
    %v600 = vadd.f32 %v198, %v599
    %v601 = vpop.f32.mrf.mxu0
    %v602 = vadd.f32 %v198, %v601
    %603 = vdwg.mxu0
    %604 = vmatpush.bf16.msra.mxu0 %v468
    %605 = vmatpush.bf16.msra.mxu0 %v464
    %606 = vmatpush.bf16.msra.mxu0 %v460
    %607 = vmatpush.bf16.msra.mxu0 %v456
    %608 = vmatpush.bf16.msra.mxu0 %v452
    %609 = vmatpush.bf16.msra.mxu0 %v448
    %610 = vmatpush.bf16.msra.mxu0 %v444
    %611 = vmatpush.bf16.msra.mxu0 %v440
    %612 = vmatmul.bf16.gmra.mxu0 %v211
    %v613 = vpop.f32.mrf.mxu0
    %v614 = vadd.f32 %v600, %v613
    %v615 = vpop.f32.mrf.mxu0
    %v616 = vadd.f32 %v602, %v615
    %617 = vdwg.mxu0
    %618 = vmatpush.bf16.msra.mxu0 %v437
    %619 = vmatpush.bf16.msra.mxu0 %v433
    %620 = vmatpush.bf16.msra.mxu0 %v429
    %621 = vmatpush.bf16.msra.mxu0 %v425
    %622 = vmatpush.bf16.msra.mxu0 %v421
    %623 = vmatpush.bf16.msra.mxu0 %v417
    %624 = vmatpush.bf16.msra.mxu0 %v413
    %625 = vmatpush.bf16.msra.mxu0 %v409
    %626 = vmatmul.bf16.gmra.mxu0 %v210
    %v627 = vpop.f32.mrf.mxu0
    %v628 = vadd.f32 %v199, %v627
    %v629 = vpop.f32.mrf.mxu0
    %v630 = vadd.f32 %v199, %v629
    %631 = vdwg.mxu0
    %632 = vmatpush.bf16.msra.mxu0 %v469
    %633 = vmatpush.bf16.msra.mxu0 %v465
    %634 = vmatpush.bf16.msra.mxu0 %v461
    %635 = vmatpush.bf16.msra.mxu0 %v457
    %636 = vmatpush.bf16.msra.mxu0 %v453
    %637 = vmatpush.bf16.msra.mxu0 %v449
    %638 = vmatpush.bf16.msra.mxu0 %v445
    %639 = vmatpush.bf16.msra.mxu0 %v441
    %640 = vmatmul.bf16.gmra.mxu0 %v211
    %v641 = vpop.f32.mrf.mxu0
    %v642 = vadd.f32 %v628, %v641
    %v643 = vpop.f32.mrf.mxu0
    %v644 = vadd.f32 %v630, %v643
    %645 = vdwg.mxu0
    %v646 = vtanh.pop %v558
    %v647 = vtanh.pop %v560
    %v648 = vxor.u32 %v586, 2147483648
    %v649 = vxor.u32 %v588, 2147483648
    %v650 = vmul.f32 %v648, 1.442695
    %v651 = vpow.pop %v650
    %v652 = vmul.f32 %v649, 1.442695
    %v653 = vpow.pop %v652
    %v654 = vadd.f32 %v651, 1.0
    %v655 = vadd.f32 %v653, 1.0
    %v656 = vrcp.pop %v654
    %v657 = vmul.f32 %v654, %v656
    %v658 = vsub.f32 1.0, %v657
    %v659 = vmul.f32 %v656, %v658
    %v660 = vadd.f32 %v656, %v659
    %vm661 = vweird.f32 %v654
    %vm662 = vweird.f32 %v656
    %vm663 = vmor %vm661, %vm662
    %v664 = vsel %vm663, %v656, %v660
    %v665 = vand.u32 2147483647, %v654
    %vm666 = vcmp.eq.f32.partialorder %v665, 8.507059e+37
    %v667 = vand.u32 %v654, 2147483648
    %v668 = vor.u32 1.1754944e-38, %v667
    %v669 = vsel %vm666, %v668, %v664
    %v670 = vmul.f32 1.0, %v669
    %v671 = vrcp.pop %v655
    %v672 = vmul.f32 %v655, %v671
    %v673 = vsub.f32 1.0, %v672
    %v674 = vmul.f32 %v671, %v673
    %v675 = vadd.f32 %v671, %v674
    %vm676 = vweird.f32 %v655
    %vm677 = vweird.f32 %v671
    %vm678 = vmor %vm676, %vm677
    %v679 = vsel %vm678, %v671, %v675
    %v680 = vand.u32 2147483647, %v655
    %vm681 = vcmp.eq.f32.partialorder %v680, 8.507059e+37
    %v682 = vand.u32 %v655, 2147483648
    %v683 = vor.u32 1.1754944e-38, %v682
    %v684 = vsel %vm681, %v683, %v679
    %v685 = vmul.f32 1.0, %v684
    %v686 = vxor.u32 %v614, 2147483648
    %v687 = vxor.u32 %v616, 2147483648
    %v688 = vmul.f32 %v686, 1.442695
    %v689 = vpow.pop %v688
    %v690 = vmul.f32 %v687, 1.442695
    %v691 = vpow.pop %v690
    %v692 = vadd.f32 %v689, 1.0
    %v693 = vadd.f32 %v691, 1.0
    %v694 = vrcp.pop %v692
    %v695 = vmul.f32 %v692, %v694
    %v696 = vsub.f32 1.0, %v695
    %v697 = vmul.f32 %v694, %v696
    %v698 = vadd.f32 %v694, %v697
    %vm699 = vweird.f32 %v692
    %vm700 = vweird.f32 %v694
    %vm701 = vmor %vm699, %vm700
    %v702 = vsel %vm701, %v694, %v698
    %v703 = vand.u32 2147483647, %v692
    %vm704 = vcmp.eq.f32.partialorder %v703, 8.507059e+37
    %v705 = vand.u32 %v692, 2147483648
    %v706 = vor.u32 1.1754944e-38, %v705
    %v707 = vsel %vm704, %v706, %v702
    %v708 = vmul.f32 1.0, %v707
    %v709 = vrcp.pop %v693
    %v710 = vmul.f32 %v693, %v709
    %v711 = vsub.f32 1.0, %v710
    %v712 = vmul.f32 %v709, %v711
    %v713 = vadd.f32 %v709, %v712
    %vm714 = vweird.f32 %v693
    %vm715 = vweird.f32 %v709
    %vm716 = vmor %vm714, %vm715
    %v717 = vsel %vm716, %v709, %v713
    %v718 = vand.u32 2147483647, %v693
    %vm719 = vcmp.eq.f32.partialorder %v718, 8.507059e+37
    %v720 = vand.u32 %v693, 2147483648
    %v721 = vor.u32 1.1754944e-38, %v720
    %v722 = vsel %vm719, %v721, %v717
    %v723 = vmul.f32 1.0, %v722
    %v724 = vtanh.pop %v642
    %v725 = vtanh.pop %v644
    %v726 = vld [vmem:[#allocation4] sm:$0xff]
    %v727 = vld [vmem:[#allocation4 + $0x8] sm:$0xff]
    %v728 = vmul.f32 %v726, %v708
    %v729 = vmul.f32 %v727, %v723
    %v730 = vmul.f32 %v646, %v670
    %v731 = vmul.f32 %v647, %v685
    %v732 = vadd.f32 %v728, %v730
    %v733 = vadd.f32 %v729, %v731
    %v734 = vtanh.pop %v732
    %v735 = vtanh.pop %v733
    %v736 = vmul.f32 %v734, %v724
    %v737 = vmul.f32 %v735, %v725
    %738 = vst [vmem:[#allocation4] sm:$0xff] %v732
    %739 = vst [vmem:[#allocation4 + $0x8] sm:$0xff] %v733
    %v740 = vpack.c.bf16 %v736, %v736
    %v741 = vpack.c.bf16 %v737, %v737
    %742 = vst [vmem:[#allocation3] sm:$0xf] %v740
    %743 = vst [vmem:[#allocation3 + $0x4] sm:$0xf] %v741
    %744 = vst [vmem:[#allocation14] sm:$0xff] %v736
    %745 = vst [vmem:[#allocation14 + $0x8] sm:$0xff] %v737
    %746 = vst [vmem:[#allocation15] sm:$0xff] %v732
    %747 = vst [vmem:[#allocation15 + $0x8] sm:$0xff] %v733
    // Predicated region
    $region46: #{tpu_custom_call.1} parent=1 // pred_check
      _
    $region47: #{tpu_custom_call.1} parent=1 // pred_check_branch
      %749 = sbr.rel (0) target = $region49
    $region48: #{tpu_custom_call.1} parent=1 // pred_region
      %751 = vsyncadd [#allocation7], 128
      %s752 = sshll.u32 [#allocation14], 4
      %s753 = int_to_ptr.vmem [resolvable:$true] %s752
      %s754 = sshll.u32 %s5, 4
      %s755 = int_to_ptr.hbm [resolvable:$true] %s754
      %760 = dma.vmem_to_hbm [thread:$0]  %s753, 128, %s755, [#allocation7], 128, 128, 8
    $region49: #{tpu_custom_call.1} parent=1 // pred_fallthru
      _
    // Predicated region
    $region50: #{tpu_custom_call.1} parent=1 // pred_check
      _
    $region51: #{tpu_custom_call.1} parent=1 // pred_check_branch
      %762 = sbr.rel (0) target = $region53
    $region52: #{tpu_custom_call.1} parent=1 // pred_region
      %764 = vsyncadd [#allocation16], 128
      %s765 = sshll.u32 [#allocation15], 4
      %s766 = int_to_ptr.vmem [resolvable:$true] %s765
      %s767 = sshll.u32 %s6, 4
      %s768 = int_to_ptr.hbm [resolvable:$true] %s767
      %773 = dma.vmem_to_hbm [thread:$0]  %s766, 128, %s768, [#allocation16], 128, 128, 8
    $region53: #{tpu_custom_call.1} parent=1 // pred_fallthru
      _
    // Predicated region
    $region54: #{tpu_custom_call.1} parent=1 // pred_check
      _
    $region55: #{tpu_custom_call.1} parent=1 // pred_check_branch
      %775 = sbr.rel (0) target = $region57
    $region56: #{tpu_custom_call.1} parent=1 // pred_region
      %777 = dma.done [#allocation7], 256
    $region57: #{tpu_custom_call.1} parent=1 // pred_fallthru
      _
    // Predicated region
    $region58: #{tpu_custom_call.1} parent=1 // pred_check
      _
    $region59: #{tpu_custom_call.1} parent=1 // pred_check_branch
      %779 = sbr.rel (0) target = $region61
    $region60: #{tpu_custom_call.1} parent=1 // pred_region
      %781 = dma.done [#allocation16], 256
    $region61: #{tpu_custom_call.1} parent=1 // pred_fallthru
      _
    %782 = vsyncpa [#allocation6], 1
    %783 = vsyncpa [#allocation9], 1
    %784 = vsyncpa [#allocation12], 1
    %785 = vsyncpa [#allocation7], 1
    %786 = vsyncpa [#allocation16], 1

// kernel: tpu_custom_call.1
$region0: #{tpu_custom_call.1}
  #allocation0 [shape = 'u32[]', space=smem, size = 0x4, offset = 0x4, fixed_abs, tag = 'smem constant byte address 0x4 - core index']
  #allocation1 [shape = 'u32[72,128]{1,0:T(1,128)}', space=vmem, size = 0x9000, scoped, tag = 'internal scratch']
  #allocation2 [shape = 'bf16[16,256]{1,0:T(8,128)(2,1)}', space=vmem, size = 0x2000, scoped, tag = 'scratch operand']
  #allocation3 [shape = 'bf16[16,128]{1,0:T(8,128)(2,1)}', space=vmem, size = 0x1000, scoped, tag = 'scratch operand']
  #allocation4 [shape = 'f32[16,128]{1,0:T(8,128)}', space=vmem, size = 0x2000, scoped, tag = 'scratch operand']
  %s0 = inlined_call_operand.hbm [shape: f32[1,8,32], index: 0, kind: input, shape index: {}]
  %s1 = inlined_call_operand.hbm [shape: f32[8,128], index: 1, kind: input, shape index: {}]
  %s2 = inlined_call_operand.hbm [shape: f32[8,128], index: 2, kind: input, shape index: {}]
  %s3 = inlined_call_operand.hbm [shape: bf16[256,512], index: 3, kind: input, shape index: {}]
  %s4 = inlined_call_operand.hbm [shape: f32[1,512], index: 4, kind: input, shape index: {}]
  %s5 = inlined_call_operand.hbm [shape: f32[1,8,128], index: 5, kind: output, shape index: {0}]
  %s6 = inlined_call_operand.hbm [shape: f32[1,8,128], index: 6, kind: output, shape index: {1}]
  %7 = xla_tuple %s5, %s6
  %s8 = sld [smem:[#allocation0]]
  $region62: #{tpu_custom_call.1} parent=0
    _
  %s10 = ssub.s32 1, %s8
  %s11 = scalar_select 0, %s10, %s8
  $region1: #{tpu_custom_call.1} parent=0
    #allocation5 [shape = 'u8[8192]{0}', space=vmem, size = 0x2000, scoped, tag = 'input window, operand 0, single buffered']
    #allocation6 [shape = 's32[1]{0}', space=sflag, size = 0x4, scoped, tag = 'scoped memory for tpu_custom_call.1']
    #allocation7 [shape = 's32[1]{0}', space=sflag, size = 0x4, scoped, tag = 'scoped memory for tpu_custom_call.1']
    #allocation8 [shape = 'u8[8192]{0}', space=vmem, size = 0x2000, scoped, tag = 'input window, operand 1, single buffered']
    #allocation9 [shape = 's32[1]{0}', space=sflag, size = 0x4, scoped, tag = 'scoped memory for tpu_custom_call.1']
    #allocation10 [shape = 'u8[8192]{0}', space=vmem, size = 0x2000, scoped, tag = 'input window, operand 2, single buffered']
    #allocation11 [shape = 'u8[262144]{0}', space=vmem, size = 0x40000, scoped, tag = 'input window, operand 3, single buffered']
    #allocation12 [shape = 's32[1]{0}', space=sflag, size = 0x4, scoped, tag = 'scoped memory for tpu_custom_call.1']
    #allocation13 [shape = 'u8[2048]{0}', space=vmem, size = 0x800, scoped, tag = 'input window, operand 4, single buffered']
    #allocation14 [shape = 'u8[8192]{0}', space=vmem, size = 0x2000, scoped, tag = 'output window, operand 0, single buffered']
    #allocation15 [shape = 'u8[8192]{0}', space=vmem, size = 0x2000, scoped, tag = 'output window, operand 1, single buffered']
    #allocation16 [shape = 's32[1]{0}', space=sflag, size = 0x4, scoped, tag = 'scoped memory for tpu_custom_call.1']
    %12 = vsyncpa [#allocation6], 0
    %13 = vsyncpa [#allocation9], 0
    %14 = vsyncpa [#allocation12], 0
    %15 = vsyncpa [#allocation7], 0
    %16 = vsyncpa [#allocation16], 0
    // Predicated region
    $region2: #{tpu_custom_call.1} parent=1 // pred_check
      _
    $region3: #{tpu_custom_call.1} parent=1 // pred_check_branch
      %18 = sbr.rel (0) target = $region5
    $region4: #{tpu_custom_call.1} parent=1 // pred_region
      %20 = vsyncadd [#allocation6], 128
      %s21 = sshll.u32 %s0, 4
      %s22 = int_to_ptr.hbm [resolvable:$true] %s21
      %s23 = sshll.u32 [#allocation5], 4
      %s24 = int_to_ptr.vmem [resolvable:$true] %s23
      %29 = dma.hbm_to_vmem [thread:$0]  %s22, 128, %s24, [#allocation6], 128, 128, 8
    $region5: #{tpu_custom_call.1} parent=1 // pred_fallthru
      _
    // Predicated region
    $region6: #{tpu_custom_call.1} parent=1 // pred_check
      _
    $region7: #{tpu_custom_call.1} parent=1 // pred_check_branch
      %31 = sbr.rel (0) target = $region9
    $region8: #{tpu_custom_call.1} parent=1 // pred_region
      %33 = vsyncadd [#allocation9], 128
      %s34 = sshll.u32 %s1, 4
      %s35 = int_to_ptr.hbm [resolvable:$true] %s34
      %s36 = sshll.u32 [#allocation8], 4
      %s37 = int_to_ptr.vmem [resolvable:$true] %s36
      %42 = dma.hbm_to_vmem [thread:$0]  %s35, 128, %s37, [#allocation9], 128, 128, 8
    $region9: #{tpu_custom_call.1} parent=1 // pred_fallthru
      _
    // Predicated region
    $region10: #{tpu_custom_call.1} parent=1 // pred_check
      _
    $region11: #{tpu_custom_call.1} parent=1 // pred_check_branch
      %44 = sbr.rel (0) target = $region13
    $region12: #{tpu_custom_call.1} parent=1 // pred_region
      %46 = vsyncadd [#allocation9], 128
      %s47 = sshll.u32 %s2, 4
      %s48 = int_to_ptr.hbm [resolvable:$true] %s47
      %s49 = sshll.u32 [#allocation10], 4
      %s50 = int_to_ptr.vmem [resolvable:$true] %s49
      %55 = dma.hbm_to_vmem [thread:$0]  %s48, 128, %s50, [#allocation9], 128, 128, 8
    $region13: #{tpu_custom_call.1} parent=1 // pred_fallthru
      _
    // Predicated region
    $region14: #{tpu_custom_call.1} parent=1 // pred_check
      _
    $region15: #{tpu_custom_call.1} parent=1 // pred_check_branch
      %57 = sbr.rel (0) target = $region17
    $region16: #{tpu_custom_call.1} parent=1 // pred_region
      %59 = vsyncadd [#allocation12], 0
      %s60 = sshll.u32 %s3, 4
      %s61 = int_to_ptr.hbm [resolvable:$true] %s60
      %s62 = sshll.u32 [#allocation11], 4
      %s63 = int_to_ptr.vmem [resolvable:$true] %s62
      %68 = dma.hbm_to_vmem [thread:$0]  %s61, 8192, %s63, [#allocation12], 256, 256, 16
    $region17: #{tpu_custom_call.1} parent=1 // pred_fallthru
      _
    // Predicated region
    $region18: #{tpu_custom_call.1} parent=1 // pred_check
      _
    $region19: #{tpu_custom_call.1} parent=1 // pred_check_branch
      %70 = sbr.rel (0) target = $region21
    $region20: #{tpu_custom_call.1} parent=1 // pred_region
      %72 = vsyncadd [#allocation12], 0
      %s74 = sshll.u32 %s4, 4
      %s75 = int_to_ptr.hbm [resolvable:$true] %s74
      %s76 = sshll.u32 [#allocation13], 4
      %s77 = int_to_ptr.vmem [resolvable:$true] %s76
      %79 = dma.hbm_to_vmem [thread:$0]  %s75, 64, %s77, [#allocation12]
    $region21: #{tpu_custom_call.1} parent=1 // pred_fallthru
      _
    // Predicated region
    $region22: #{tpu_custom_call.1} parent=1 // pred_check
      _
    $region23: #{tpu_custom_call.1} parent=1 // pred_check_branch
      %81 = sbr.rel (0) target = $region25
    $region24: #{tpu_custom_call.1} parent=1 // pred_region
      %83 = dma.done [#allocation6], 256
    $region25: #{tpu_custom_call.1} parent=1 // pred_fallthru
      _
    // Predicated region
    $region26: #{tpu_custom_call.1} parent=1 // pred_check
      _
    $region27: #{tpu_custom_call.1} parent=1 // pred_check_branch
      %85 = sbr.rel (0) target = $region29
    $region28: #{tpu_custom_call.1} parent=1 // pred_region
      %87 = dma.done [#allocation9], 256
    $region29: #{tpu_custom_call.1} parent=1 // pred_fallthru
      _
    // Predicated region
    $region30: #{tpu_custom_call.1} parent=1 // pred_check
      _
    $region31: #{tpu_custom_call.1} parent=1 // pred_check_branch
      %89 = sbr.rel (0) target = $region33
    $region32: #{tpu_custom_call.1} parent=1 // pred_region
      %91 = dma.done [#allocation9], 256
    $region33: #{tpu_custom_call.1} parent=1 // pred_fallthru
      _
    // Predicated region
    $region34: #{tpu_custom_call.1} parent=1 // pred_check
      _
    $region35: #{tpu_custom_call.1} parent=1 // pred_check_branch
      %93 = sbr.rel (0) target = $region37
    $region36: #{tpu_custom_call.1} parent=1 // pred_region
      %95 = dma.done [#allocation12], 8192
    $region37: #{tpu_custom_call.1} parent=1 // pred_fallthru
      _
    // Predicated region
    $region38: #{tpu_custom_call.1} parent=1 // pred_check
      _
    $region39: #{tpu_custom_call.1} parent=1 // pred_check_branch
      %97 = sbr.rel (0) target = $region41
    $region40: #{tpu_custom_call.1} parent=1 // pred_region
      %99 = dma.done [#allocation12], 64
    $region41: #{tpu_custom_call.1} parent=1 // pred_fallthru
      _
    %p101 = scmp.eq.s32.totalorder 0, 0
    // Predicated region
    $region42: #{tpu_custom_call.1} parent=1 // pred_check
      %p102 = pneg %p101
    $region43: #{tpu_custom_call.1} parent=1 // pred_check_branch
      %104 = sbr.rel (%p102) target = $region45
    $region44: #{tpu_custom_call.1} parent=1 // pred_region
      %105 = vst [vmem:[#allocation2] sm:$0xff] 0
      %106 = vst [vmem:[#allocation2 + $0x8] sm:$0xff] 0
      %v107 = vld [vmem:[#allocation8] sm:$0xff]
      %v108 = vld [vmem:[#allocation8 + $0x8] sm:$0xff]
      %v109 = vpack.c.bf16 %v107, %v107
      %v110 = vpack.c.bf16 %v108, %v108
      %111 = vst [vmem:[#allocation3] sm:$0xf] %v109
      %112 = vst [vmem:[#allocation3 + $0x4] sm:$0xf] %v110
      %v113 = vld [vmem:[#allocation10] sm:$0xff]
      %v114 = vld [vmem:[#allocation10 + $0x8] sm:$0xff]
      %115 = vst [vmem:[#allocation4] sm:$0xff] %v113
      %116 = vst [vmem:[#allocation4 + $0x8] sm:$0xff] %v114
    $region45: #{tpu_custom_call.1} parent=1 // pred_fallthru
      _
    %v117 = vld [vmem:[#allocation5] sm:$0xff]
    %v118 = vld [vmem:[#allocation5 + $0x8] sm:$0xff]
    %v119 = vpack.c.bf16 %v117, %v117
    %v120 = vpack.c.bf16 %v118, %v118
    %vm121 = vcmask 257024
    %122 = vst.msk [vmem:[#allocation2] sm:$0xf] %vm121, %v119
    %123 = vst.msk [vmem:[#allocation2 + $0x8] sm:$0xf] %vm121, %v120
    %v124 = vld [vmem:[#allocation3] sm:$0xf]
    %v125 = vld [vmem:[#allocation3 + $0x4] sm:$0xf]
    %126 = vst [vmem:[#allocation2 + $0x4] sm:$0xf] %v124
    %127 = vst [vmem:[#allocation2 + $0xc] sm:$0xf] %v125
    %v128 = vld [vmem:[#allocation2] sm:$0xff]
    %v129 = vld [vmem:[#allocation2 + $0x8] sm:$0xff]
    %v130 = vld [vmem:[#allocation11] sm:$0xff]
    %v131 = vld [vmem:[#allocation11 + $0x8] sm:$0xff]
    %v132 = vld [vmem:[#allocation11 + $0x10] sm:$0xff]
    %v133 = vld [vmem:[#allocation11 + $0x18] sm:$0xff]
    %v134 = vld [vmem:[#allocation11 + $0x20] sm:$0xff]
    %v135 = vld [vmem:[#allocation11 + $0x28] sm:$0xff]
    %v136 = vld [vmem:[#allocation11 + $0x30] sm:$0xff]
    %v137 = vld [vmem:[#allocation11 + $0x38] sm:$0xff]
    %v138 = vld [vmem:[#allocation11 + $0x40] sm:$0xff]
    %v139 = vld [vmem:[#allocation11 + $0x48] sm:$0xff]
    %v140 = vld [vmem:[#allocation11 + $0x50] sm:$0xff]
    %v141 = vld [vmem:[#allocation11 + $0x58] sm:$0xff]
    %v142 = vld [vmem:[#allocation11 + $0x60] sm:$0xff]
    %v143 = vld [vmem:[#allocation11 + $0x68] sm:$0xff]
    %v144 = vld [vmem:[#allocation11 + $0x70] sm:$0xff]
    %v145 = vld [vmem:[#allocation11 + $0x78] sm:$0xff]
    %v146 = vld [vmem:[#allocation11 + $0x80] sm:$0xff]
    %v147 = vld [vmem:[#allocation11 + $0x88] sm:$0xff]
    %v148 = vld [vmem:[#allocation11 + $0x90] sm:$0xff]
    %v149 = vld [vmem:[#allocation11 + $0x98] sm:$0xff]
    %v150 = vld [vmem:[#allocation11 + $0xa0] sm:$0xff]
    %v151 = vld [vmem:[#allocation11 + $0xa8] sm:$0xff]
    %v152 = vld [vmem:[#allocation11 + $0xb0] sm:$0xff]
    %v153 = vld [vmem:[#allocation11 + $0xb8] sm:$0xff]
    %v154 = vld [vmem:[#allocation11 + $0xc0] sm:$0xff]
    %v155 = vld [vmem:[#allocation11 + $0xc8] sm:$0xff]
    %v156 = vld [vmem:[#allocation11 + $0xd0] sm:$0xff]
    %v157 = vld [vmem:[#allocation11 + $0xd8] sm:$0xff]
    %v158 = vld [vmem:[#allocation11 + $0xe0] sm:$0xff]
    %v159 = vld [vmem:[#allocation11 + $0xe8] sm:$0xff]
    %v160 = vld [vmem:[#allocation11 + $0xf0] sm:$0xff]
    %v161 = vld [vmem:[#allocation11 + $0xf8] sm:$0xff]
    %v162 = vld [vmem:[#allocation11 + $0x100] sm:$0xff]
    %v163 = vld [vmem:[#allocation11 + $0x108] sm:$0xff]
    %v164 = vld [vmem:[#allocation11 + $0x110] sm:$0xff]
    %v165 = vld [vmem:[#allocation11 + $0x118] sm:$0xff]
    %v166 = vld [vmem:[#allocation11 + $0x120] sm:$0xff]
    %v167 = vld [vmem:[#allocation11 + $0x128] sm:$0xff]
    %v168 = vld [vmem:[#allocation11 + $0x130] sm:$0xff]
    %v169 = vld [vmem:[#allocation11 + $0x138] sm:$0xff]
    %v170 = vld [vmem:[#allocation11 + $0x140] sm:$0xff]
    %v171 = vld [vmem:[#allocation11 + $0x148] sm:$0xff]
    %v172 = vld [vmem:[#allocation11 + $0x150] sm:$0xff]
    %v173 = vld [vmem:[#allocation11 + $0x158] sm:$0xff]
    %v174 = vld [vmem:[#allocation11 + $0x160] sm:$0xff]
    %v175 = vld [vmem:[#allocation11 + $0x168] sm:$0xff]
    %v176 = vld [vmem:[#allocation11 + $0x170] sm:$0xff]
    %v177 = vld [vmem:[#allocation11 + $0x178] sm:$0xff]
    %v178 = vld [vmem:[#allocation11 + $0x180] sm:$0xff]
    %v179 = vld [vmem:[#allocation11 + $0x188] sm:$0xff]
    %v180 = vld [vmem:[#allocation11 + $0x190] sm:$0xff]
    %v181 = vld [vmem:[#allocation11 + $0x198] sm:$0xff]
    %v182 = vld [vmem:[#allocation11 + $0x1a0] sm:$0xff]
    %v183 = vld [vmem:[#allocation11 + $0x1a8] sm:$0xff]
    %v184 = vld [vmem:[#allocation11 + $0x1b0] sm:$0xff]
    %v185 = vld [vmem:[#allocation11 + $0x1b8] sm:$0xff]
    %v186 = vld [vmem:[#allocation11 + $0x1c0] sm:$0xff]
    %v187 = vld [vmem:[#allocation11 + $0x1c8] sm:$0xff]
    %v188 = vld [vmem:[#allocation11 + $0x1d0] sm:$0xff]
    %v189 = vld [vmem:[#allocation11 + $0x1d8] sm:$0xff]
    %v190 = vld [vmem:[#allocation11 + $0x1e0] sm:$0xff]
    %v191 = vld [vmem:[#allocation11 + $0x1e8] sm:$0xff]
    %v192 = vld [vmem:[#allocation11 + $0x1f0] sm:$0xff]
    %v193 = vld [vmem:[#allocation11 + $0x1f8] sm:$0xff]
    %v194 = vld [vmem:[#allocation13] sm:$0xf]
    %v196 = vperm.slane %v194, 0
    %v197 = vperm.slane %v194, 1
    %v198 = vperm.slane %v194, 2
    %v199 = vperm.slane %v194, 3
    %v206 = vunpack.c.l.b16 %v128
    %v207 = vunpack.c.h.b16 %v128
    %v208 = vunpack.c.l.b16 %v129
    %v209 = vunpack.c.h.b16 %v129
    %v210 = vpack.c.b16 %v208, %v206
    %v211 = vpack.c.b16 %v209, %v207
    %v278 = vunpack.c.l.b16 %v130
    %v279 = vunpack.c.h.b16 %v130
    %v280 = vunpack.c.l.b16 %v131
    %v281 = vunpack.c.h.b16 %v131
    %v282 = vunpack.c.l.b16 %v132
    %v283 = vunpack.c.h.b16 %v132
    %v284 = vunpack.c.l.b16 %v133
    %v285 = vunpack.c.h.b16 %v133
    %v286 = vunpack.c.l.b16 %v134
    %v287 = vunpack.c.h.b16 %v134
    %v288 = vunpack.c.l.b16 %v135
    %v289 = vunpack.c.h.b16 %v135
    %v290 = vunpack.c.l.b16 %v136
    %v291 = vunpack.c.h.b16 %v136
    %v292 = vunpack.c.l.b16 %v137
    %v293 = vunpack.c.h.b16 %v137
    %v294 = vunpack.c.l.b16 %v138
    %v295 = vunpack.c.h.b16 %v138
    %v296 = vunpack.c.l.b16 %v139
    %v297 = vunpack.c.h.b16 %v139
    %v298 = vunpack.c.l.b16 %v140
    %v299 = vunpack.c.h.b16 %v140
    %v300 = vunpack.c.l.b16 %v141
    %v301 = vunpack.c.h.b16 %v141
    %v302 = vunpack.c.l.b16 %v142
    %v303 = vunpack.c.h.b16 %v142
    %v304 = vunpack.c.l.b16 %v143
    %v305 = vunpack.c.h.b16 %v143
    %v306 = vunpack.c.l.b16 %v144
    %v307 = vunpack.c.h.b16 %v144
    %v308 = vunpack.c.l.b16 %v145
    %v309 = vunpack.c.h.b16 %v145
    %v310 = vunpack.c.l.b16 %v146
    %v311 = vunpack.c.h.b16 %v146
    %v312 = vunpack.c.l.b16 %v147
    %v313 = vunpack.c.h.b16 %v147
    %v314 = vunpack.c.l.b16 %v148
    %v315 = vunpack.c.h.b16 %v148
    %v316 = vunpack.c.l.b16 %v149
    %v317 = vunpack.c.h.b16 %v149
    %v318 = vunpack.c.l.b16 %v150
    %v319 = vunpack.c.h.b16 %v150
    %v320 = vunpack.c.l.b16 %v151
    %v321 = vunpack.c.h.b16 %v151
    %v322 = vunpack.c.l.b16 %v152
    %v323 = vunpack.c.h.b16 %v152
    %v324 = vunpack.c.l.b16 %v153
    %v325 = vunpack.c.h.b16 %v153
    %v326 = vunpack.c.l.b16 %v154
    %v327 = vunpack.c.h.b16 %v154
    %v328 = vunpack.c.l.b16 %v155
    %v329 = vunpack.c.h.b16 %v155
    %v330 = vunpack.c.l.b16 %v156
    %v331 = vunpack.c.h.b16 %v156
    %v332 = vunpack.c.l.b16 %v157
    %v333 = vunpack.c.h.b16 %v157
    %v334 = vunpack.c.l.b16 %v158
    %v335 = vunpack.c.h.b16 %v158
    %v336 = vunpack.c.l.b16 %v159
    %v337 = vunpack.c.h.b16 %v159
    %v338 = vunpack.c.l.b16 %v160
    %v339 = vunpack.c.h.b16 %v160
    %v340 = vunpack.c.l.b16 %v161
    %v341 = vunpack.c.h.b16 %v161
    %v342 = vunpack.c.l.b16 %v162
    %v343 = vunpack.c.h.b16 %v162
    %v344 = vunpack.c.l.b16 %v163
    %v345 = vunpack.c.h.b16 %v163
    %v346 = vunpack.c.l.b16 %v164
    %v347 = vunpack.c.h.b16 %v164
    %v348 = vunpack.c.l.b16 %v165
    %v349 = vunpack.c.h.b16 %v165
    %v350 = vunpack.c.l.b16 %v166
    %v351 = vunpack.c.h.b16 %v166
    %v352 = vunpack.c.l.b16 %v167
    %v353 = vunpack.c.h.b16 %v167
    %v354 = vunpack.c.l.b16 %v168
    %v355 = vunpack.c.h.b16 %v168
    %v356 = vunpack.c.l.b16 %v169
    %v357 = vunpack.c.h.b16 %v169
    %v358 = vunpack.c.l.b16 %v170
    %v359 = vunpack.c.h.b16 %v170
    %v360 = vunpack.c.l.b16 %v171
    %v361 = vunpack.c.h.b16 %v171
    %v362 = vunpack.c.l.b16 %v172
    %v363 = vunpack.c.h.b16 %v172
    %v364 = vunpack.c.l.b16 %v173
    %v365 = vunpack.c.h.b16 %v173
    %v366 = vunpack.c.l.b16 %v174
    %v367 = vunpack.c.h.b16 %v174
    %v368 = vunpack.c.l.b16 %v175
    %v369 = vunpack.c.h.b16 %v175
    %v370 = vunpack.c.l.b16 %v176
    %v371 = vunpack.c.h.b16 %v176
    %v372 = vunpack.c.l.b16 %v177
    %v373 = vunpack.c.h.b16 %v177
    %v374 = vunpack.c.l.b16 %v178
    %v375 = vunpack.c.h.b16 %v178
    %v376 = vunpack.c.l.b16 %v179
    %v377 = vunpack.c.h.b16 %v179
    %v378 = vunpack.c.l.b16 %v180
    %v379 = vunpack.c.h.b16 %v180
    %v380 = vunpack.c.l.b16 %v181
    %v381 = vunpack.c.h.b16 %v181
    %v382 = vunpack.c.l.b16 %v182
    %v383 = vunpack.c.h.b16 %v182
    %v384 = vunpack.c.l.b16 %v183
    %v385 = vunpack.c.h.b16 %v183
    %v386 = vunpack.c.l.b16 %v184
    %v387 = vunpack.c.h.b16 %v184
    %v388 = vunpack.c.l.b16 %v185
    %v389 = vunpack.c.h.b16 %v185
    %v390 = vunpack.c.l.b16 %v186
    %v391 = vunpack.c.h.b16 %v186
    %v392 = vunpack.c.l.b16 %v187
    %v393 = vunpack.c.h.b16 %v187
    %v394 = vunpack.c.l.b16 %v188
    %v395 = vunpack.c.h.b16 %v188
    %v396 = vunpack.c.l.b16 %v189
    %v397 = vunpack.c.h.b16 %v189
    %v398 = vunpack.c.l.b16 %v190
    %v399 = vunpack.c.h.b16 %v190
    %v400 = vunpack.c.l.b16 %v191
    %v401 = vunpack.c.h.b16 %v191
    %v402 = vunpack.c.l.b16 %v192
    %v403 = vunpack.c.h.b16 %v192
    %v404 = vunpack.c.l.b16 %v193
    %v405 = vunpack.c.h.b16 %v193
    %v406 = vpack.c.b16 %v282, %v278
    %v407 = vpack.c.b16 %v283, %v279
    %v408 = vpack.c.b16 %v284, %v280
    %v409 = vpack.c.b16 %v285, %v281
    %v410 = vpack.c.b16 %v290, %v286
    %v411 = vpack.c.b16 %v291, %v287
    %v412 = vpack.c.b16 %v292, %v288
    %v413 = vpack.c.b16 %v293, %v289
    %v414 = vpack.c.b16 %v298, %v294
    %v415 = vpack.c.b16 %v299, %v295
    %v416 = vpack.c.b16 %v300, %v296
    %v417 = vpack.c.b16 %v301, %v297
    %v418 = vpack.c.b16 %v306, %v302
    %v419 = vpack.c.b16 %v307, %v303
    %v420 = vpack.c.b16 %v308, %v304
    %v421 = vpack.c.b16 %v309, %v305
    %v422 = vpack.c.b16 %v314, %v310
    %v423 = vpack.c.b16 %v315, %v311
    %v424 = vpack.c.b16 %v316, %v312
    %v425 = vpack.c.b16 %v317, %v313
    %v426 = vpack.c.b16 %v322, %v318
    %v427 = vpack.c.b16 %v323, %v319
    %v428 = vpack.c.b16 %v324, %v320
    %v429 = vpack.c.b16 %v325, %v321
    %v430 = vpack.c.b16 %v330, %v326
    %v431 = vpack.c.b16 %v331, %v327
    %v432 = vpack.c.b16 %v332, %v328
    %v433 = vpack.c.b16 %v333, %v329
    %v434 = vpack.c.b16 %v338, %v334
    %v435 = vpack.c.b16 %v339, %v335
    %v436 = vpack.c.b16 %v340, %v336
    %v437 = vpack.c.b16 %v341, %v337
    %v438 = vpack.c.b16 %v346, %v342
    %v439 = vpack.c.b16 %v347, %v343
    %v440 = vpack.c.b16 %v348, %v344
    %v441 = vpack.c.b16 %v349, %v345
    %v442 = vpack.c.b16 %v354, %v350
    %v443 = vpack.c.b16 %v355, %v351
    %v444 = vpack.c.b16 %v356, %v352
    %v445 = vpack.c.b16 %v357, %v353
    %v446 = vpack.c.b16 %v362, %v358
    %v447 = vpack.c.b16 %v363, %v359
    %v448 = vpack.c.b16 %v364, %v360
    %v449 = vpack.c.b16 %v365, %v361
    %v450 = vpack.c.b16 %v370, %v366
    %v451 = vpack.c.b16 %v371, %v367
    %v452 = vpack.c.b16 %v372, %v368
    %v453 = vpack.c.b16 %v373, %v369
    %v454 = vpack.c.b16 %v378, %v374
    %v455 = vpack.c.b16 %v379, %v375
    %v456 = vpack.c.b16 %v380, %v376
    %v457 = vpack.c.b16 %v381, %v377
    %v458 = vpack.c.b16 %v386, %v382
    %v459 = vpack.c.b16 %v387, %v383
    %v460 = vpack.c.b16 %v388, %v384
    %v461 = vpack.c.b16 %v389, %v385
    %v462 = vpack.c.b16 %v394, %v390
    %v463 = vpack.c.b16 %v395, %v391
    %v464 = vpack.c.b16 %v396, %v392
    %v465 = vpack.c.b16 %v397, %v393
    %v466 = vpack.c.b16 %v402, %v398
    %v467 = vpack.c.b16 %v403, %v399
    %v468 = vpack.c.b16 %v404, %v400
    %v469 = vpack.c.b16 %v405, %v401
    %534 = vmatpush.bf16.msra.mxu0 %v434
    %535 = vmatpush.bf16.msra.mxu0 %v430
    %536 = vmatpush.bf16.msra.mxu0 %v426
    %537 = vmatpush.bf16.msra.mxu0 %v422
    %538 = vmatpush.bf16.msra.mxu0 %v418
    %539 = vmatpush.bf16.msra.mxu0 %v414
    %540 = vmatpush.bf16.msra.mxu0 %v410
    %541 = vmatpush.bf16.msra.mxu0 %v406
    %542 = vmatmul.bf16.gmra.mxu0 %v210
    %v543 = vpop.f32.mrf.mxu0
    %v544 = vadd.f32 %v196, %v543
    %v545 = vpop.f32.mrf.mxu0
    %v546 = vadd.f32 %v196, %v545
    %547 = vdwg.mxu0
    %548 = vmatpush.bf16.msra.mxu0 %v466
    %549 = vmatpush.bf16.msra.mxu0 %v462
    %550 = vmatpush.bf16.msra.mxu0 %v458
    %551 = vmatpush.bf16.msra.mxu0 %v454
    %552 = vmatpush.bf16.msra.mxu0 %v450
    %553 = vmatpush.bf16.msra.mxu0 %v446
    %554 = vmatpush.bf16.msra.mxu0 %v442
    %555 = vmatpush.bf16.msra.mxu0 %v438
    %556 = vmatmul.bf16.gmra.mxu0 %v211
    %v557 = vpop.f32.mrf.mxu0
    %v558 = vadd.f32 %v544, %v557
    %v559 = vpop.f32.mrf.mxu0
    %v560 = vadd.f32 %v546, %v559
    %561 = vdwg.mxu0
    %562 = vmatpush.bf16.msra.mxu0 %v435
    %563 = vmatpush.bf16.msra.mxu0 %v431
    %564 = vmatpush.bf16.msra.mxu0 %v427
    %565 = vmatpush.bf16.msra.mxu0 %v423
    %566 = vmatpush.bf16.msra.mxu0 %v419
    %567 = vmatpush.bf16.msra.mxu0 %v415
    %568 = vmatpush.bf16.msra.mxu0 %v411
    %569 = vmatpush.bf16.msra.mxu0 %v407
    %570 = vmatmul.bf16.gmra.mxu0 %v210
    %v571 = vpop.f32.mrf.mxu0
    %v572 = vadd.f32 %v197, %v571
    %v573 = vpop.f32.mrf.mxu0
    %v574 = vadd.f32 %v197, %v573
    %575 = vdwg.mxu0
    %576 = vmatpush.bf16.msra.mxu0 %v467
    %577 = vmatpush.bf16.msra.mxu0 %v463
    %578 = vmatpush.bf16.msra.mxu0 %v459
    %579 = vmatpush.bf16.msra.mxu0 %v455
    %580 = vmatpush.bf16.msra.mxu0 %v451
    %581 = vmatpush.bf16.msra.mxu0 %v447
    %582 = vmatpush.bf16.msra.mxu0 %v443
    %583 = vmatpush.bf16.msra.mxu0 %v439
    %584 = vmatmul.bf16.gmra.mxu0 %v211
    %v585 = vpop.f32.mrf.mxu0
    %v586 = vadd.f32 %v572, %v585
    %v587 = vpop.f32.mrf.mxu0
    %v588 = vadd.f32 %v574, %v587
    %589 = vdwg.mxu0
    %590 = vmatpush.bf16.msra.mxu0 %v436
    %591 = vmatpush.bf16.msra.mxu0 %v432
    %592 = vmatpush.bf16.msra.mxu0 %v428
    %593 = vmatpush.bf16.msra.mxu0 %v424
    %594 = vmatpush.bf16.msra.mxu0 %v420
    %595 = vmatpush.bf16.msra.mxu0 %v416
    %596 = vmatpush.bf16.msra.mxu0 %v412
    %597 = vmatpush.bf16.msra.mxu0 %v408
    %598 = vmatmul.bf16.gmra.mxu0 %v210
    %v599 = vpop.f32.mrf.mxu0
    %v600 = vadd.f32 %v198, %v599
    %v601 = vpop.f32.mrf.mxu0
    %v602 = vadd.f32 %v198, %v601
    %603 = vdwg.mxu0
    %604 = vmatpush.bf16.msra.mxu0 %v468
    %605 = vmatpush.bf16.msra.mxu0 %v464
    %606 = vmatpush.bf16.msra.mxu0 %v460
    %607 = vmatpush.bf16.msra.mxu0 %v456
    %608 = vmatpush.bf16.msra.mxu0 %v452
    %609 = vmatpush.bf16.msra.mxu0 %v448
    %610 = vmatpush.bf16.msra.mxu0 %v444
    %611 = vmatpush.bf16.msra.mxu0 %v440
    %612 = vmatmul.bf16.gmra.mxu0 %v211
    %v613 = vpop.f32.mrf.mxu0
    %v614 = vadd.f32 %v600, %v613
    %v615 = vpop.f32.mrf.mxu0
    %v616 = vadd.f32 %v602, %v615
    %617 = vdwg.mxu0
    %618 = vmatpush.bf16.msra.mxu0 %v437
    %619 = vmatpush.bf16.msra.mxu0 %v433
    %620 = vmatpush.bf16.msra.mxu0 %v429
    %621 = vmatpush.bf16.msra.mxu0 %v425
    %622 = vmatpush.bf16.msra.mxu0 %v421
    %623 = vmatpush.bf16.msra.mxu0 %v417
    %624 = vmatpush.bf16.msra.mxu0 %v413
    %625 = vmatpush.bf16.msra.mxu0 %v409
    %626 = vmatmul.bf16.gmra.mxu0 %v210
    %v627 = vpop.f32.mrf.mxu0
    %v628 = vadd.f32 %v199, %v627
    %v629 = vpop.f32.mrf.mxu0
    %v630 = vadd.f32 %v199, %v629
    %631 = vdwg.mxu0
    %632 = vmatpush.bf16.msra.mxu0 %v469
    %633 = vmatpush.bf16.msra.mxu0 %v465
    %634 = vmatpush.bf16.msra.mxu0 %v461
    %635 = vmatpush.bf16.msra.mxu0 %v457
    %636 = vmatpush.bf16.msra.mxu0 %v453
    %637 = vmatpush.bf16.msra.mxu0 %v449
    %638 = vmatpush.bf16.msra.mxu0 %v445
    %639 = vmatpush.bf16.msra.mxu0 %v441
    %640 = vmatmul.bf16.gmra.mxu0 %v211
    %v641 = vpop.f32.mrf.mxu0
    %v642 = vadd.f32 %v628, %v641
    %v643 = vpop.f32.mrf.mxu0
    %v644 = vadd.f32 %v630, %v643
    %645 = vdwg.mxu0
    %v646 = vtanh.pop %v558
    %v647 = vtanh.pop %v560
    %v648 = vxor.u32 %v586, 2147483648
    %v649 = vxor.u32 %v588, 2147483648
    %v650 = vmul.f32 %v648, 1.442695
    %v651 = vpow.pop %v650
    %v652 = vmul.f32 %v649, 1.442695
    %v653 = vpow.pop %v652
    %v654 = vadd.f32 %v651, 1.0
    %v655 = vadd.f32 %v653, 1.0
    %v656 = vrcp.pop %v654
    %v657 = vmul.f32 %v654, %v656
    %v658 = vsub.f32 1.0, %v657
    %v659 = vmul.f32 %v656, %v658
    %v660 = vadd.f32 %v656, %v659
    %vm661 = vweird.f32 %v654
    %vm662 = vweird.f32 %v656
    %vm663 = vmor %vm661, %vm662
    %v664 = vsel %vm663, %v656, %v660
    %v665 = vand.u32 2147483647, %v654
    %vm666 = vcmp.eq.f32.partialorder %v665, 8.507059e+37
    %v667 = vand.u32 %v654, 2147483648
    %v668 = vor.u32 1.1754944e-38, %v667
    %v669 = vsel %vm666, %v668, %v664
    %v670 = vmul.f32 1.0, %v669
    %v671 = vrcp.pop %v655
    %v672 = vmul.f32 %v655, %v671
    %v673 = vsub.f32 1.0, %v672
    %v674 = vmul.f32 %v671, %v673
    %v675 = vadd.f32 %v671, %v674
    %vm676 = vweird.f32 %v655
    %vm677 = vweird.f32 %v671
    %vm678 = vmor %vm676, %vm677
    %v679 = vsel %vm678, %v671, %v675
    %v680 = vand.u32 2147483647, %v655
    %vm681 = vcmp.eq.f32.partialorder %v680, 8.507059e+37
    %v682 = vand.u32 %v655, 2147483648
    %v683 = vor.u32 1.1754944e-38, %v682
    %v684 = vsel %vm681, %v683, %v679
    %v685 = vmul.f32 1.0, %v684
    %v686 = vxor.u32 %v614, 2147483648
    %v687 = vxor.u32 %v616, 2147483648
    %v688 = vmul.f32 %v686, 1.442695
    %v689 = vpow.pop %v688
    %v690 = vmul.f32 %v687, 1.442695
    %v691 = vpow.pop %v690
    %v692 = vadd.f32 %v689, 1.0
    %v693 = vadd.f32 %v691, 1.0
    %v694 = vrcp.pop %v692
    %v695 = vmul.f32 %v692, %v694
    %v696 = vsub.f32 1.0, %v695
    %v697 = vmul.f32 %v694, %v696
    %v698 = vadd.f32 %v694, %v697
    %vm699 = vweird.f32 %v692
    %vm700 = vweird.f32 %v694
    %vm701 = vmor %vm699, %vm700
    %v702 = vsel %vm701, %v694, %v698
    %v703 = vand.u32 2147483647, %v692
    %vm704 = vcmp.eq.f32.partialorder %v703, 8.507059e+37
    %v705 = vand.u32 %v692, 2147483648
    %v706 = vor.u32 1.1754944e-38, %v705
    %v707 = vsel %vm704, %v706, %v702
    %v708 = vmul.f32 1.0, %v707
    %v709 = vrcp.pop %v693
    %v710 = vmul.f32 %v693, %v709
    %v711 = vsub.f32 1.0, %v710
    %v712 = vmul.f32 %v709, %v711
    %v713 = vadd.f32 %v709, %v712
    %vm714 = vweird.f32 %v693
    %vm715 = vweird.f32 %v709
    %vm716 = vmor %vm714, %vm715
    %v717 = vsel %vm716, %v709, %v713
    %v718 = vand.u32 2147483647, %v693
    %vm719 = vcmp.eq.f32.partialorder %v718, 8.507059e+37
    %v720 = vand.u32 %v693, 2147483648
    %v721 = vor.u32 1.1754944e-38, %v720
    %v722 = vsel %vm719, %v721, %v717
    %v723 = vmul.f32 1.0, %v722
    %v724 = vtanh.pop %v642
    %v725 = vtanh.pop %v644
    %v726 = vld [vmem:[#allocation4] sm:$0xff]
    %v727 = vld [vmem:[#allocation4 + $0x8] sm:$0xff]
    %v728 = vmul.f32 %v726, %v708
    %v729 = vmul.f32 %v727, %v723
    %v730 = vmul.f32 %v646, %v670
    %v731 = vmul.f32 %v647, %v685
    %v732 = vadd.f32 %v728, %v730
    %v733 = vadd.f32 %v729, %v731
    %v734 = vtanh.pop %v732
    %v735 = vtanh.pop %v733
    %v736 = vmul.f32 %v734, %v724
    %v737 = vmul.f32 %v735, %v725
    %738 = vst [vmem:[#allocation4] sm:$0xff] %v732
    %739 = vst [vmem:[#allocation4 + $0x8] sm:$0xff] %v733
    %v740 = vpack.c.bf16 %v736, %v736
    %v741 = vpack.c.bf16 %v737, %v737
    %742 = vst [vmem:[#allocation3] sm:$0xf] %v740
    %743 = vst [vmem:[#allocation3 + $0x4] sm:$0xf] %v741
    %744 = vst [vmem:[#allocation14] sm:$0xff] %v736
    %745 = vst [vmem:[#allocation14 + $0x8] sm:$0xff] %v737
    %746 = vst [vmem:[#allocation15] sm:$0xff] %v732
    %747 = vst [vmem:[#allocation15 + $0x8] sm:$0xff] %v733
    // Predicated region
    $region46: #{tpu_custom_call.1} parent=1 // pred_check
      _
    $region47: #{tpu_custom_call.1} parent=1 // pred_check_branch
      %749 = sbr.rel (0) target = $region49
    $region48: #{tpu_custom_call.1} parent=1 // pred_region
      %751 = vsyncadd [#allocation7], 128
      %s752 = sshll.u32 [#allocation14], 4
      %s753 = int_to_ptr.vmem [resolvable:$true] %s752
      %s754 = sshll.u32 %s5, 4
      %s755 = int_to_ptr.hbm [resolvable:$true] %s754
      %760 = dma.vmem_to_hbm [thread:$0]  %s753, 128, %s755, [#allocation7], 128, 128, 8
    $region49: #{tpu_custom_call.1} parent=1 // pred_fallthru
      _
    // Predicated region
    $region50: #{tpu_custom_call.1} parent=1 // pred_check
      _
    $region51: #{tpu_custom_call.1} parent=1 // pred_check_branch
      %762 = sbr.rel (0) target = $region53
    $region52: #{tpu_custom_call.1} parent=1 // pred_region
      %764 = vsyncadd [#allocation16], 128
      %s765 = sshll.u32 [#allocation15], 4
      %s766 = int_to_ptr.vmem [resolvable:$true] %s765
      %s767 = sshll.u32 %s6, 4
      %s768 = int_to_ptr.hbm [resolvable:$true] %s767
      %773 = dma.vmem_to_hbm [thread:$0]  %s766, 128, %s768, [#allocation16], 128, 128, 8
    $region53: #{tpu_custom_call.1} parent=1 // pred_fallthru
      _
    // Predicated region
    $region54: #{tpu_custom_call.1} parent=1 // pred_check
      _
    $region55: #{tpu_custom_call.1} parent=1 // pred_check_branch
      %775 = sbr.rel (0) target = $region57
    $region56: #{tpu_custom_call.1} parent=1 // pred_region
      %777 = dma.done [#allocation7], 256
    $region57: #{tpu_custom_call.1} parent=1 // pred_fallthru
      _
    // Predicated region
    $region58: #{tpu_custom_call.1} parent=1 // pred_check
      _
    $region59: #{tpu_custom_call.1} parent=1 // pred_check_branch
      %779 = sbr.rel (0) target = $region61
    $region60: #{tpu_custom_call.1} parent=1 // pred_region
      %781 = dma.done [#allocation16], 256
    $region61: #{tpu_custom_call.1} parent=1 // pred_fallthru
      _
    %782 = vsyncpa [#allocation6], 1
    %783 = vsyncpa [#allocation9], 1
    %784 = vsyncpa [#allocation12], 1
    %785 = vsyncpa [#allocation7], 1
    %786 = vsyncpa [#allocation16], 1

</llo_original>
